<compile_context>
chip_gen: v6e
topology: v6e:2x2x1
jax: 0.10.0
libtpu: 0.0.40
codegen_flags: <defaults>
</compile_context>

<pallas_src>
import functools

import jax
import jax.numpy as jnp
from jax.experimental import pallas as pl
from jax.experimental.pallas import tpu as pltpu

EPS = 1e-5
VMEM_LIMIT = 48 * 1024 * 1024          # scoped limit; < v7x 64 MiB physical
STREAM_VMEM_BUDGET = 28 * 1024 * 1024  # budget for double-buffered streams


def _round_up(x, m):
    return (x + m - 1) // m * m


# ---------------------------------------------------------------------------
# Pass A: im2col-conv matmul + per-tile partial BN statistics
# ---------------------------------------------------------------------------
def _conv_stats_kernel(p_ref, w_ref, y_ref, stats_ref, *, tile_m, m_total, cout):
    """p_ref: (tile_m, K) bf16        w_ref: (K, Cpad) bf16 (zero-padded cols)
       y_ref: (tile_m, Cout) bf16     pre-BN conv output tile
       stats_ref: (1, 2, Cout) f32    [sum, centered sum-of-squares] of the
                                      tile's valid (non-padded) rows."""
    y_full = jnp.dot(p_ref[...], w_ref[...], preferred_element_type=jnp.float32)
    y = y_full[:, :cout]                       # drop zero weight-padding lanes
    y_ref[...] = y.astype(y_ref.dtype)

    # Welford/Chan-combinable per-tile partials. Padded rows of p are zero so
    # they contribute 0 to sum_t; they are masked out of the deviations.
    row0 = pl.program_id(0) * tile_m
    valid = (jax.lax.broadcasted_iota(jnp.int32, y.shape, 0) + row0
             < m_total).astype(jnp.float32)
    n_t = jnp.minimum(tile_m, m_total - row0).astype(jnp.float32)  # >= 1
    sum_t = jnp.sum(y, axis=0, keepdims=True)                      # (1, Cout)
    mean_t = sum_t / n_t
    dev = (y - mean_t) * valid
    m2_t = jnp.sum(dev * dev, axis=0, keepdims=True)               # (1, Cout)
    stats_ref[...] = jnp.concatenate([sum_t, m2_t], axis=0)[None]  # (1,2,Cout)


def _im2col_3x3(x, stride):
    """x: (N, H, W, C) -> (N*Ho*Wo, 9*C), 3x3 kernel, padding=1, (kh,kw,c) order."""
    N, H, W, C = x.shape
    Ho = (H + 2 - 3) // stride + 1
    Wo = (W + 2 - 3) // stride + 1
    xp = jnp.pad(x, ((0, 0), (1, 1), (1, 1), (0, 0)))
    taps = []
    for kh in range(3):
        for kw in range(3):
            taps.append(
                xp[:, kh:kh + stride * Ho:stride, kw:kw + stride * Wo:stride, :]
            )
    p = jnp.stack(taps, axis=3)                       # (N, Ho, Wo, 9, C)
    return p.reshape(N * Ho * Wo, 9 * C), Ho, Wo


def _pick_tile_m(M16, K, Cout, Cpad):
    """Largest VMEM-safe row tile, forced to give >=2 grid tiles when possible
    (so v7x's two TensorCores both get work)."""
    # double-buffered bf16 patches + bf16 y tile, plus f32 matmul intermediate
    bytes_per_row = 2 * (2 * K + 2 * Cout) + 4 * Cpad
    w_bytes = 2 * (K * Cpad * 2)                       # resident weight buffers
    budget = max(2 * 1024 * 1024, STREAM_VMEM_BUDGET - w_bytes)
    cap = max(16, (budget // bytes_per_row) // 16 * 16)
    tile_m = min(4096, cap, M16)
    if tile_m == M16 and M16 > 16:
        tile_m = _round_up((M16 + 1) // 2, 16)         # split into >=2 tiles
    return tile_m


def conv_bn_act(x, w, gamma, beta, *, stride, apply_relu):
    """x: (N, H, W, Cin) NHWC.  w: (3, 3, Cin, Cout) HWIO.  Returns NHWC f32
    (lazy -- the BN affine / ReLU fuses into the consumer)."""
    N = x.shape[0]
    Cin = w.shape[2]
    Cout = w.shape[3]

    # im2col patches in bf16 (dominant streaming operand at half the bytes)
    p, Ho, Wo = _im2col_3x3(x.astype(jnp.bfloat16), stride)
    M, K = p.shape

    Cpad = _round_up(Cout, 128)            # VMEM weight operand only
    M16 = _round_up(M, 16)
    tile_m = _pick_tile_m(M16, K, Cout, Cpad)
    M_pad = _round_up(M16, tile_m)
    n_tiles = M_pad // tile_m

    p = jnp.pad(p, ((0, M_pad - M), (0, 0)))
    w2 = jnp.pad(w.reshape(9 * Cin, Cout).astype(jnp.bfloat16),
                 ((0, 0), (0, Cpad - Cout)))

    # ---- Pass A: matmul + partial statistics ------------------------------
    y, stats = pl.pallas_call(
        functools.partial(_conv_stats_kernel,
                          tile_m=tile_m, m_total=M, cout=Cout),
        out_shape=(
            jax.ShapeDtypeStruct((M_pad, Cout), jnp.bfloat16),
            jax.ShapeDtypeStruct((n_tiles, 2, Cout), jnp.float32),
        ),
        grid=(n_tiles,),
        in_specs=[
            pl.BlockSpec((tile_m, K), lambda i: (i, 0)),    # streaming patches
            pl.BlockSpec((K, Cpad), lambda i: (0, 0)),      # resident weights
        ],
        out_specs=(
            pl.BlockSpec((tile_m, Cout), lambda i: (i, 0)),
            pl.BlockSpec((1, 2, Cout), lambda i: (i, 0, 0)),
        ),
        compiler_params=pltpu.CompilerParams(
            dimension_semantics=("parallel",),
            vmem_limit_bytes=VMEM_LIMIT,
        ),
    )(p, w2)

    # ---- Combine per-tile partials (Chan) -> exact biased batch stats -----
    sums = stats[:, 0, :]                              # (n_tiles, Cout)
    m2s = stats[:, 1, :]                               # (n_tiles, Cout)
    counts = jnp.asarray(
        [float(max(1, min(tile_m, M - i * tile_m))) for i in range(n_tiles)],
        dtype=jnp.float32)[:, None]                    # (n_tiles, 1)
    mean = jnp.sum(sums, axis=0) / M
    mean_t = sums / counts
    var = (jnp.sum(m2s, axis=0)
           + jnp.sum(counts * jnp.square(mean_t - mean), axis=0)) / M
    var = jnp.maximum(var, 0.0)
    inv = jax.lax.rsqrt(var + EPS)
    scale = gamma * inv
    shift = beta - mean * scale

    # ---- BN affine (+ReLU) in plain JAX: one FMA/element, fused by XLA ----
    out = y[:M].astype(jnp.float32) * scale + shift
    if apply_relu:
        out = jnp.maximum(out, 0.0)
    return out.reshape(N, Ho, Wo, Cout)


def init_stem_params(key, in_dim, out_dim):
    mid = out_dim // 2
    ks = jax.random.split(key, 3)

    def conv_w(k, cin, cout):
        # deterministic, small-scale init; HWIO layout
        return 0.1 * jax.random.normal(k, (3, 3, cin, cout), dtype=jnp.float32)

    # Conv biases are omitted: under training-mode BatchNorm the per-channel
    # bias is removed exactly by the batch-mean subtraction.
    return {
        "w1": conv_w(ks[0], in_dim, mid),
        "g1": jnp.ones((mid,), jnp.float32), "beta1": jnp.zeros((mid,), jnp.float32),
        "w2": conv_w(ks[1], mid, out_dim),
        "g2": jnp.ones((out_dim,), jnp.float32), "beta2": jnp.zeros((out_dim,), jnp.float32),
        "w3": conv_w(ks[2], out_dim, out_dim),
        "g3": jnp.ones((out_dim,), jnp.float32), "beta3": jnp.zeros((out_dim,), jnp.float32),
    }


@jax.jit
def stem_forward(x_nchw, params):
    """Equivalent of Stem.forward.  x: (N, C, H, W) -> (N, out_dim, H//4, W//4)."""
    x = jnp.transpose(x_nchw, (0, 2, 3, 1))  # NCHW -> NHWC
    x = conv_bn_act(x, params["w1"], params["g1"], params["beta1"],
                    stride=2, apply_relu=True)
    x = conv_bn_act(x, params["w2"], params["g2"], params["beta2"],
                    stride=2, apply_relu=True)
    x = conv_bn_act(x, params["w3"], params["g3"], params["beta3"],
                    stride=1, apply_relu=False)
    return jnp.transpose(x, (0, 3, 1, 2))  # NHWC -> NCHW


if __name__ == "__main__":
    key = jax.random.PRNGKey(0)
    k_x, k_p = jax.random.split(key)

    N, IN_DIM, OUT_DIM, IMG = 2, 4, 32, 16
    x = jax.random.normal(k_x, (N, IN_DIM, IMG, IMG), dtype=jnp.float32)
    params = init_stem_params(k_p, IN_DIM, OUT_DIM)

    out = stem_forward(x, params)
    jax.block_until_ready(out)

    assert out.shape == (N, OUT_DIM, IMG // 4, IMG // 4), out.shape
    assert bool(jnp.all(jnp.isfinite(out)))
    print("KERNEL_OK")
</pallas_src>

<mosaic_0001>
module attributes {stable_mosaic.version = 11 : i64} {
  func.func @_conv_stats_kernel(%arg0: i32, %arg1: memref<64x36xbf16, #tpu.memory_space<vmem>>, %arg2: memref<36x128xbf16, #tpu.memory_space<vmem>>, %arg3: memref<64x16xbf16, #tpu.memory_space<vmem>>, %arg4: memref<1x2x16xf32, #tpu.memory_space<vmem>>) attributes {dimension_semantics = [#tpu.dimension_semantics<parallel>], iteration_bounds = array<i64: 2>, scalar_prefetch = 0 : i64, scratch_operands = 0 : i64, tpu.core_type = #tpu.core_type<tc>, window_params = [{transform_indices = @transform_0, window_bounds = array<i64: 64, 36>}, {pipeline_mode = #tpu.pipeline_mode<synchronous>, transform_indices = @transform_1, window_bounds = array<i64: 36, 128>}, {transform_indices = @transform_2, window_bounds = array<i64: 64, 16>}, {transform_indices = @transform_3, window_bounds = array<i64: 1, 2, 16>}]} {
    %c0 = arith.constant 0 : index
    %c0_0 = arith.constant 0 : index
    %0 = vector.load %arg1[%c0, %c0_0] : memref<64x36xbf16, #tpu.memory_space<vmem>>, vector<64x36xbf16>
    %c0_1 = arith.constant 0 : index
    %c0_2 = arith.constant 0 : index
    %1 = vector.load %arg2[%c0_1, %c0_2] : memref<36x128xbf16, #tpu.memory_space<vmem>>, vector<36x128xbf16>
    %cst = arith.constant dense<0.000000e+00> : vector<64x128xf32>
    %2 = tpu.matmul %0, %1, %cst {dimension_numbers = #tpu.dot_dimension_numbers<[1], [0], [0], [1], [0, 0, 1, 1], [], []>} : vector<64x36xbf16>, vector<36x128xbf16>, vector<64x128xf32> -> vector<64x128xf32>
    %3 = vector.extract_strided_slice %2 {offsets = [0, 0], sizes = [64, 16], strides = [1, 1]} : vector<64x128xf32> to vector<64x16xf32>
    %4 = arith.truncf %3 : vector<64x16xf32> to vector<64x16xbf16>
    %c0_3 = arith.constant 0 : index
    %c0_4 = arith.constant 0 : index
    %5 = vector.load %arg3[%c0_3, %c0_4] : memref<64x16xbf16, #tpu.memory_space<vmem>>, vector<64x16xbf16>
    tpu.vector_store %arg3[%c0_3, %c0_4], %4 {strides = array<i32>} : memref<64x16xbf16, #tpu.memory_space<vmem>>, vector<64x16xbf16>,
    %c64_i32 = arith.constant 64 : i32
    %6 = arith.muli %arg0, %c64_i32 : i32
    %7 = tpu.iota {dimensions = array<i32: 0>} : vector<64x16xi32>
    %8 = vector.broadcast %6 : i32 to vector<64x16xi32>
    %9 = arith.addi %7, %8 : vector<64x16xi32>
    %c128_i32 = arith.constant 128 : i32
    %10 = vector.broadcast %c128_i32 : i32 to vector<64x16xi32>
    %11 = arith.cmpi slt, %9, %10 : vector<64x16xi32>
    %12 = arith.extui %11 : vector<64x16xi1> to vector<64x16xi32>
    %13 = arith.sitofp %12 : vector<64x16xi32> to vector<64x16xf32>
    %c128_i32_5 = arith.constant 128 : i32
    %14 = arith.subi %c128_i32_5, %6 : i32
    %c64_i32_6 = arith.constant 64 : i32
    %15 = arith.minsi %c64_i32_6, %14 : i32
    %16 = arith.sitofp %15 : i32 to f32
    %cst_7 = arith.constant dense<0.000000e+00> : vector<16xf32>
    %17 = vector.multi_reduction <add>, %3, %cst_7 [0] : vector<64x16xf32> to vector<16xf32>
    %18 = vector.shape_cast %17 : vector<16xf32> to vector<1x16xf32>
    %19 = vector.broadcast %16 : f32 to vector<1x16xf32>
    %20 = arith.divf %18, %19 : vector<1x16xf32>
    %21 = vector.broadcast %20 : vector<1x16xf32> to vector<64x16xf32>
    %22 = arith.subf %3, %21 : vector<64x16xf32>
    %23 = arith.mulf %22, %13 : vector<64x16xf32>
    %24 = arith.mulf %23, %23 : vector<64x16xf32>
    %cst_8 = arith.constant dense<0.000000e+00> : vector<16xf32>
    %25 = vector.multi_reduction <add>, %24, %cst_8 [0] : vector<64x16xf32> to vector<16xf32>
    %26 = vector.shape_cast %25 : vector<16xf32> to vector<1x16xf32>
    %27 = tpu.concatenate %18, %26 in 0 : vector<1x16xf32>, vector<1x16xf32> -> vector<2x16xf32>
    %28 = vector.shape_cast %27 : vector<2x16xf32> to vector<1x2x16xf32>
    %c0_9 = arith.constant 0 : index
    %c0_10 = arith.constant 0 : index
    %c0_11 = arith.constant 0 : index
    %29 = vector.load %arg4[%c0_9, %c0_10, %c0_11] : memref<1x2x16xf32, #tpu.memory_space<vmem>>, vector<1x2x16xf32>
    tpu.vector_store %arg4[%c0_9, %c0_10, %c0_11], %28 {strides = array<i32>} : memref<1x2x16xf32, #tpu.memory_space<vmem>>, vector<1x2x16xf32>,
    return
  }
  func.func @transform_0(%arg0: i32) -> (i32, i32) {
    %c0_i32 = arith.constant 0 : i32
    %c0_i32_0 = arith.constant 0 : i32
    return %arg0, %c0_i32 : i32, i32
  }
  func.func @transform_1(%arg0: i32) -> (i32, i32) {
    %c0_i32 = arith.constant 0 : i32
    %c0_i32_0 = arith.constant 0 : i32
    %c0_i32_1 = arith.constant 0 : i32
    return %c0_i32, %c0_i32_0 : i32, i32
  }
  func.func @transform_2(%arg0: i32) -> (i32, i32) {
    %c0_i32 = arith.constant 0 : i32
    %c0_i32_0 = arith.constant 0 : i32
    return %arg0, %c0_i32 : i32, i32
  }
  func.func @transform_3(%arg0: i32) -> (i32, i32, i32) {
    %c0_i32 = arith.constant 0 : i32
    %c0_i32_0 = arith.constant 0 : i32
    %c0_i32_1 = arith.constant 0 : i32
    return %arg0, %c0_i32, %c0_i32_0 : i32, i32, i32
  }
}

module attributes {stable_mosaic.version = 11 : i64} {
  func.func @_conv_stats_kernel(%arg0: i32, %arg1: memref<16x144xbf16, #tpu.memory_space<vmem>>, %arg2: memref<144x128xbf16, #tpu.memory_space<vmem>>, %arg3: memref<16x32xbf16, #tpu.memory_space<vmem>>, %arg4: memref<1x2x32xf32, #tpu.memory_space<vmem>>) attributes {dimension_semantics = [#tpu.dimension_semantics<parallel>], iteration_bounds = array<i64: 2>, scalar_prefetch = 0 : i64, scratch_operands = 0 : i64, tpu.core_type = #tpu.core_type<tc>, window_params = [{transform_indices = @transform_0, window_bounds = array<i64: 16, 144>}, {pipeline_mode = #tpu.pipeline_mode<synchronous>, transform_indices = @transform_1, window_bounds = array<i64: 144, 128>}, {transform_indices = @transform_2, window_bounds = array<i64: 16, 32>}, {transform_indices = @transform_3, window_bounds = array<i64: 1, 2, 32>}]} {
    %c0 = arith.constant 0 : index
    %c0_0 = arith.constant 0 : index
    %0 = vector.load %arg1[%c0, %c0_0] : memref<16x144xbf16, #tpu.memory_space<vmem>>, vector<16x144xbf16>
    %c0_1 = arith.constant 0 : index
    %c0_2 = arith.constant 0 : index
    %1 = vector.load %arg2[%c0_1, %c0_2] : memref<144x128xbf16, #tpu.memory_space<vmem>>, vector<144x128xbf16>
    %cst = arith.constant dense<0.000000e+00> : vector<16x128xf32>
    %2 = tpu.matmul %0, %1, %cst {dimension_numbers = #tpu.dot_dimension_numbers<[1], [0], [0], [1], [0, 0, 1, 1], [], []>} : vector<16x144xbf16>, vector<144x128xbf16>, vector<16x128xf32> -> vector<16x128xf32>
    %3 = vector.extract_strided_slice %2 {offsets = [0, 0], sizes = [16, 32], strides = [1, 1]} : vector<16x128xf32> to vector<16x32xf32>
    %4 = arith.truncf %3 : vector<16x32xf32> to vector<16x32xbf16>
    %c0_3 = arith.constant 0 : index
    %c0_4 = arith.constant 0 : index
    %5 = vector.load %arg3[%c0_3, %c0_4] : memref<16x32xbf16, #tpu.memory_space<vmem>>, vector<16x32xbf16>
    tpu.vector_store %arg3[%c0_3, %c0_4], %4 {strides = array<i32>} : memref<16x32xbf16, #tpu.memory_space<vmem>>, vector<16x32xbf16>,
    %c16_i32 = arith.constant 16 : i32
    %6 = arith.muli %arg0, %c16_i32 : i32
    %7 = tpu.iota {dimensions = array<i32: 0>} : vector<16x32xi32>
    %8 = vector.broadcast %6 : i32 to vector<16x32xi32>
    %9 = arith.addi %7, %8 : vector<16x32xi32>
    %c32_i32 = arith.constant 32 : i32
    %10 = vector.broadcast %c32_i32 : i32 to vector<16x32xi32>
    %11 = arith.cmpi slt, %9, %10 : vector<16x32xi32>
    %12 = arith.extui %11 : vector<16x32xi1> to vector<16x32xi32>
    %13 = arith.sitofp %12 : vector<16x32xi32> to vector<16x32xf32>
    %c32_i32_5 = arith.constant 32 : i32
    %14 = arith.subi %c32_i32_5, %6 : i32
    %c16_i32_6 = arith.constant 16 : i32
    %15 = arith.minsi %c16_i32_6, %14 : i32
    %16 = arith.sitofp %15 : i32 to f32
    %cst_7 = arith.constant dense<0.000000e+00> : vector<32xf32>
    %17 = vector.multi_reduction <add>, %3, %cst_7 [0] : vector<16x32xf32> to vector<32xf32>
    %18 = vector.shape_cast %17 : vector<32xf32> to vector<1x32xf32>
    %19 = vector.broadcast %16 : f32 to vector<1x32xf32>
    %20 = arith.divf %18, %19 : vector<1x32xf32>
    %21 = vector.broadcast %20 : vector<1x32xf32> to vector<16x32xf32>
    %22 = arith.subf %3, %21 : vector<16x32xf32>
    %23 = arith.mulf %22, %13 : vector<16x32xf32>
    %24 = arith.mulf %23, %23 : vector<16x32xf32>
    %cst_8 = arith.constant dense<0.000000e+00> : vector<32xf32>
    %25 = vector.multi_reduction <add>, %24, %cst_8 [0] : vector<16x32xf32> to vector<32xf32>
    %26 = vector.shape_cast %25 : vector<32xf32> to vector<1x32xf32>
    %27 = tpu.concatenate %18, %26 in 0 : vector<1x32xf32>, vector<1x32xf32> -> vector<2x32xf32>
    %28 = vector.shape_cast %27 : vector<2x32xf32> to vector<1x2x32xf32>
    %c0_9 = arith.constant 0 : index
    %c0_10 = arith.constant 0 : index
    %c0_11 = arith.constant 0 : index
    %29 = vector.load %arg4[%c0_9, %c0_10, %c0_11] : memref<1x2x32xf32, #tpu.memory_space<vmem>>, vector<1x2x32xf32>
    tpu.vector_store %arg4[%c0_9, %c0_10, %c0_11], %28 {strides = array<i32>} : memref<1x2x32xf32, #tpu.memory_space<vmem>>, vector<1x2x32xf32>,
    return
  }
  func.func @transform_0(%arg0: i32) -> (i32, i32) {
    %c0_i32 = arith.constant 0 : i32
    %c0_i32_0 = arith.constant 0 : i32
    return %arg0, %c0_i32 : i32, i32
  }
  func.func @transform_1(%arg0: i32) -> (i32, i32) {
    %c0_i32 = arith.constant 0 : i32
    %c0_i32_0 = arith.constant 0 : i32
    %c0_i32_1 = arith.constant 0 : i32
    return %c0_i32, %c0_i32_0 : i32, i32
  }
  func.func @transform_2(%arg0: i32) -> (i32, i32) {
    %c0_i32 = arith.constant 0 : i32
    %c0_i32_0 = arith.constant 0 : i32
    return %arg0, %c0_i32 : i32, i32
  }
  func.func @transform_3(%arg0: i32) -> (i32, i32, i32) {
    %c0_i32 = arith.constant 0 : i32
    %c0_i32_0 = arith.constant 0 : i32
    %c0_i32_1 = arith.constant 0 : i32
    return %arg0, %c0_i32, %c0_i32_0 : i32, i32, i32
  }
}

module attributes {stable_mosaic.version = 11 : i64} {
  func.func @_conv_stats_kernel(%arg0: i32, %arg1: memref<16x288xbf16, #tpu.memory_space<vmem>>, %arg2: memref<288x128xbf16, #tpu.memory_space<vmem>>, %arg3: memref<16x32xbf16, #tpu.memory_space<vmem>>, %arg4: memref<1x2x32xf32, #tpu.memory_space<vmem>>) attributes {dimension_semantics = [#tpu.dimension_semantics<parallel>], iteration_bounds = array<i64: 2>, scalar_prefetch = 0 : i64, scratch_operands = 0 : i64, tpu.core_type = #tpu.core_type<tc>, window_params = [{transform_indices = @transform_0, window_bounds = array<i64: 16, 288>}, {pipeline_mode = #tpu.pipeline_mode<synchronous>, transform_indices = @transform_1, window_bounds = array<i64: 288, 128>}, {transform_indices = @transform_2, window_bounds = array<i64: 16, 32>}, {transform_indices = @transform_3, window_bounds = array<i64: 1, 2, 32>}]} {
    %c0 = arith.constant 0 : index
    %c0_0 = arith.constant 0 : index
    %0 = vector.load %arg1[%c0, %c0_0] : memref<16x288xbf16, #tpu.memory_space<vmem>>, vector<16x288xbf16>
    %c0_1 = arith.constant 0 : index
    %c0_2 = arith.constant 0 : index
    %1 = vector.load %arg2[%c0_1, %c0_2] : memref<288x128xbf16, #tpu.memory_space<vmem>>, vector<288x128xbf16>
    %cst = arith.constant dense<0.000000e+00> : vector<16x128xf32>
    %2 = tpu.matmul %0, %1, %cst {dimension_numbers = #tpu.dot_dimension_numbers<[1], [0], [0], [1], [0, 0, 1, 1], [], []>} : vector<16x288xbf16>, vector<288x128xbf16>, vector<16x128xf32> -> vector<16x128xf32>
    %3 = vector.extract_strided_slice %2 {offsets = [0, 0], sizes = [16, 32], strides = [1, 1]} : vector<16x128xf32> to vector<16x32xf32>
    %4 = arith.truncf %3 : vector<16x32xf32> to vector<16x32xbf16>
    %c0_3 = arith.constant 0 : index
    %c0_4 = arith.constant 0 : index
    %5 = vector.load %arg3[%c0_3, %c0_4] : memref<16x32xbf16, #tpu.memory_space<vmem>>, vector<16x32xbf16>
    tpu.vector_store %arg3[%c0_3, %c0_4], %4 {strides = array<i32>} : memref<16x32xbf16, #tpu.memory_space<vmem>>, vector<16x32xbf16>,
    %c16_i32 = arith.constant 16 : i32
    %6 = arith.muli %arg0, %c16_i32 : i32
    %7 = tpu.iota {dimensions = array<i32: 0>} : vector<16x32xi32>
    %8 = vector.broadcast %6 : i32 to vector<16x32xi32>
    %9 = arith.addi %7, %8 : vector<16x32xi32>
    %c32_i32 = arith.constant 32 : i32
    %10 = vector.broadcast %c32_i32 : i32 to vector<16x32xi32>
    %11 = arith.cmpi slt, %9, %10 : vector<16x32xi32>
    %12 = arith.extui %11 : vector<16x32xi1> to vector<16x32xi32>
    %13 = arith.sitofp %12 : vector<16x32xi32> to vector<16x32xf32>
    %c32_i32_5 = arith.constant 32 : i32
    %14 = arith.subi %c32_i32_5, %6 : i32
    %c16_i32_6 = arith.constant 16 : i32
    %15 = arith.minsi %c16_i32_6, %14 : i32
    %16 = arith.sitofp %15 : i32 to f32
    %cst_7 = arith.constant dense<0.000000e+00> : vector<32xf32>
    %17 = vector.multi_reduction <add>, %3, %cst_7 [0] : vector<16x32xf32> to vector<32xf32>
    %18 = vector.shape_cast %17 : vector<32xf32> to vector<1x32xf32>
    %19 = vector.broadcast %16 : f32 to vector<1x32xf32>
    %20 = arith.divf %18, %19 : vector<1x32xf32>
    %21 = vector.broadcast %20 : vector<1x32xf32> to vector<16x32xf32>
    %22 = arith.subf %3, %21 : vector<16x32xf32>
    %23 = arith.mulf %22, %13 : vector<16x32xf32>
    %24 = arith.mulf %23, %23 : vector<16x32xf32>
    %cst_8 = arith.constant dense<0.000000e+00> : vector<32xf32>
    %25 = vector.multi_reduction <add>, %24, %cst_8 [0] : vector<16x32xf32> to vector<32xf32>
    %26 = vector.shape_cast %25 : vector<32xf32> to vector<1x32xf32>
    %27 = tpu.concatenate %18, %26 in 0 : vector<1x32xf32>, vector<1x32xf32> -> vector<2x32xf32>
    %28 = vector.shape_cast %27 : vector<2x32xf32> to vector<1x2x32xf32>
    %c0_9 = arith.constant 0 : index
    %c0_10 = arith.constant 0 : index
    %c0_11 = arith.constant 0 : index
    %29 = vector.load %arg4[%c0_9, %c0_10, %c0_11] : memref<1x2x32xf32, #tpu.memory_space<vmem>>, vector<1x2x32xf32>
    tpu.vector_store %arg4[%c0_9, %c0_10, %c0_11], %28 {strides = array<i32>} : memref<1x2x32xf32, #tpu.memory_space<vmem>>, vector<1x2x32xf32>,
    return
  }
  func.func @transform_0(%arg0: i32) -> (i32, i32) {
    %c0_i32 = arith.constant 0 : i32
    %c0_i32_0 = arith.constant 0 : i32
    return %arg0, %c0_i32 : i32, i32
  }
  func.func @transform_1(%arg0: i32) -> (i32, i32) {
    %c0_i32 = arith.constant 0 : i32
    %c0_i32_0 = arith.constant 0 : i32
    %c0_i32_1 = arith.constant 0 : i32
    return %c0_i32, %c0_i32_0 : i32, i32
  }
  func.func @transform_2(%arg0: i32) -> (i32, i32) {
    %c0_i32 = arith.constant 0 : i32
    %c0_i32_0 = arith.constant 0 : i32
    return %arg0, %c0_i32 : i32, i32
  }
  func.func @transform_3(%arg0: i32) -> (i32, i32, i32) {
    %c0_i32 = arith.constant 0 : i32
    %c0_i32_0 = arith.constant 0 : i32
    %c0_i32_1 = arith.constant 0 : i32
    return %arg0, %c0_i32, %c0_i32_0 : i32, i32, i32
  }
}

</mosaic_0001>

<llo_original>
// kernel: stem_forward.3
$region0: #{stem_forward.3}
  #allocation0 [shape = 'u32[]', space=smem, size = 0x4, offset = 0x4, fixed_abs, tag = 'smem constant byte address 0x4 - core index']
  #allocation1 [shape = 'u32[144,128]{1,0:T(1,128)}', space=vmem, size = 0x12000, scoped, tag = 'internal scratch']
  %s0 = inlined_call_operand.vmem [shape: bf16[128,36], index: 0, kind: input, shape index: {}]
  %s1 = inlined_call_operand.vmem [shape: bf16[36,128], index: 1, kind: input, shape index: {}]
  %s2 = inlined_call_operand.vmem [shape: bf16[128,16], index: 2, kind: output, shape index: {0}]
  %s3 = inlined_call_operand.vmem [shape: f32[2,2,16], index: 3, kind: output, shape index: {1}]
  %4 = xla_tuple %s2, %s3
  %s5 = sld [smem:[#allocation0]]
  $region49: #{stem_forward.3} parent=0
    _
  %s7 = ssub.s32 1, %s5
  %s8 = scalar_select 0, %s7, %s5
  loop: start=0, step=1, limit=4
  $region2: #{stem_forward.3} parent=0 // loop_pre_header
    _
  $region3: #{stem_forward.3} parent=0 // loop_header
    %s10 = sphi 0, %s14
    %p11 = scmp.ge.s32.totalorder %s10, 4
    %s20 = sphi 0, %s22
    %s23 = sphi 0, %s20
    %s24 = sphi 0, %s23
    %s40 = sphi 0, %s24
    %s44 = sphi 0, %s44
    %s46 = sphi 0, %s44
    %s47 = sphi 0, %s46
    %s61 = sphi 0, %s47
    %s67 = sphi 0, %s69
    %s70 = sphi 0, %s67
    %s71 = sphi 0, %s70
    %s87 = sphi 0, %s71
    %s93 = sphi 0, %s95
    %s96 = sphi 0, %s93
    %s97 = sphi 0, %s96
    %s113 = sphi 0, %s97
  $region4: #{stem_forward.3} parent=0 // loop_header_branch
    %13 = sbr.rel (%p11) target = $region8
  $region5: #{stem_forward.3} parent=0 // loop_body
    %s15 = ssub.s32 %s10, 1
    %s16 = ssub.s32 %s10, 2
    %s17 = sadd.s32 %s10, 1
    %s18 = ssub.s32 %s10, %s17
    %p19 = scmp.eq.s32.totalorder %s18, 0
    %s21 = sadd.s32 %s20, 1
    %s22 = scalar_select %p19, %s20, %s21
    %p25 = pneg %p19
    %p26 = scmp.eq.s32.totalorder %s10, 1
    %p27 = por %p25, %p26
    %p28 = scmp.ne.s32.totalorder %s20, %s23
    %p29 = scmp.eq.s32.totalorder %s10, 0
    %p30 = por %p28, %p29
    %p31 = scmp.ne.s32.totalorder %s20, %s23
    %p32 = scmp.eq.s32.totalorder %s15, 1
    %p33 = por %p31, %p32
    %p34 = scmp.ne.s32.totalorder %s23, %s24
    %p35 = scmp.eq.s32.totalorder %s15, 0
    %p36 = por %p34, %p35
    %p37 = scmp.ne.s32.totalorder %s23, %s24
    %p38 = scmp.eq.s32.totalorder %s16, 1
    %p39 = por %p37, %p38
    %p41 = scmp.ne.s32.totalorder %s24, %s40
    %p42 = scmp.eq.s32.totalorder %s16, 0
    %p43 = por %p41, %p42
    %s45 = sadd.s32 %s44, 1
    %p48 = scmp.eq.s32.totalorder %s10, 1
    %p49 = scmp.ne.s32.totalorder %s44, %s46
    %p50 = scmp.eq.s32.totalorder %s10, 0
    %p51 = por %p49, %p50
    %p52 = scmp.ne.s32.totalorder %s44, %s46
    %p53 = scmp.eq.s32.totalorder %s15, 1
    %p54 = por %p52, %p53
    %p55 = scmp.ne.s32.totalorder %s46, %s47
    %p56 = scmp.eq.s32.totalorder %s15, 0
    %p57 = por %p55, %p56
    %p58 = scmp.ne.s32.totalorder %s46, %s47
    %p59 = scmp.eq.s32.totalorder %s16, 1
    %p60 = por %p58, %p59
    %p62 = scmp.ne.s32.totalorder %s47, %s61
    %p63 = scmp.eq.s32.totalorder %s16, 0
    %p64 = por %p62, %p63
    %s65 = ssub.s32 %s10, %s17
    %p66 = scmp.eq.s32.totalorder %s65, 0
    %s68 = sadd.s32 %s67, 1
    %s69 = scalar_select %p66, %s67, %s68
    %p72 = pneg %p66
    %p73 = scmp.eq.s32.totalorder %s10, 1
    %p74 = por %p72, %p73
    %p75 = scmp.ne.s32.totalorder %s67, %s70
    %p76 = scmp.eq.s32.totalorder %s10, 0
    %p77 = por %p75, %p76
    %p78 = scmp.ne.s32.totalorder %s67, %s70
    %p79 = scmp.eq.s32.totalorder %s15, 1
    %p80 = por %p78, %p79
    %p81 = scmp.ne.s32.totalorder %s70, %s71
    %p82 = scmp.eq.s32.totalorder %s15, 0
    %p83 = por %p81, %p82
    %p84 = scmp.ne.s32.totalorder %s70, %s71
    %p85 = scmp.eq.s32.totalorder %s16, 1
    %p86 = por %p84, %p85
    %p88 = scmp.ne.s32.totalorder %s71, %s87
    %p89 = scmp.eq.s32.totalorder %s16, 0
    %p90 = por %p88, %p89
    %s91 = ssub.s32 %s10, %s17
    %p92 = scmp.eq.s32.totalorder %s91, 0
    %s94 = sadd.s32 %s93, 1
    %s95 = scalar_select %p92, %s93, %s94
    %p98 = pneg %p92
    %p99 = scmp.eq.s32.totalorder %s10, 1
    %p100 = por %p98, %p99
    %p101 = scmp.ne.s32.totalorder %s93, %s96
    %p102 = scmp.eq.s32.totalorder %s10, 0
    %p103 = por %p101, %p102
    %p104 = scmp.ne.s32.totalorder %s93, %s96
    %p105 = scmp.eq.s32.totalorder %s15, 1
    %p106 = por %p104, %p105
    %p107 = scmp.ne.s32.totalorder %s96, %s97
    %p108 = scmp.eq.s32.totalorder %s15, 0
    %p109 = por %p107, %p108
    %p110 = scmp.ne.s32.totalorder %s96, %s97
    %p111 = scmp.eq.s32.totalorder %s16, 1
    %p112 = por %p110, %p111
    %p114 = scmp.ne.s32.totalorder %s97, %s113
    %p115 = scmp.eq.s32.totalorder %s16, 0
    %p116 = por %p114, %p115
    %p117 = scmp.le.s32.totalorder 1, %s10
    %p118 = scmp.lt.s32.totalorder %s10, 3
    %p119 = pnand %p117, %p118
    %p120 = pneg %p119
    // Predicated region
    $region9: #{stem_forward.3} parent=5 // pred_check
      _
    $region10: #{stem_forward.3} parent=5 // pred_check_branch
      %122 = sbr.rel (%p119) target = $region12
    $region11: #{stem_forward.3} parent=5 // pred_region
      %s123 = ssub.s32 %s10, 1
      // Predicated region
      $region13: #{stem_forward.3} parent=11 // pred_check
        %p124 = pneg %p57
      $region14: #{stem_forward.3} parent=11 // pred_check_branch
        %126 = sbr.rel (%p124) target = $region16
      $region15: #{stem_forward.3} parent=11 // pred_region
        _
      $region16: #{stem_forward.3} parent=11 // pred_fallthru
        _
    $region12: #{stem_forward.3} parent=5 // pred_fallthru
      _
    %p127 = scmp.lt.s32.totalorder %s10, 2
    // Predicated region
    $region17: #{stem_forward.3} parent=5 // pred_check
      %p128 = pneg %p127
    $region18: #{stem_forward.3} parent=5 // pred_check_branch
      %130 = sbr.rel (%p128) target = $region20
    $region19: #{stem_forward.3} parent=5 // pred_region
      // Predicated region
      $region21: #{stem_forward.3} parent=19 // pred_check
        %p131 = pneg %p30
      $region22: #{stem_forward.3} parent=19 // pred_check_branch
        %133 = sbr.rel (%p131) target = $region24
      $region23: #{stem_forward.3} parent=19 // pred_region
        %s134 = smul.u32 8, %s10
        %p135 = scmp.lt.s32.totalorder %s134, 15
        %s136 = scalar_select %p135, %s134, 15
        %s137 = smul.addr %s136, 4
        %s138 = scalar_lea.vmem %s0, %s137
        %s139 = smul.u32 8, %s10
      $region24: #{stem_forward.3} parent=19 // pred_fallthru
        _
    $region20: #{stem_forward.3} parent=5 // pred_fallthru
      _
    %p140 = scmp.le.s32.totalorder 1, %s10
    %p141 = scmp.lt.s32.totalorder %s10, 3
    %p142 = pnand %p140, %p141
    %p143 = pneg %p142
    // Predicated region
    $region25: #{stem_forward.3} parent=5 // pred_check
      _
    $region26: #{stem_forward.3} parent=5 // pred_check_branch
      %145 = sbr.rel (%p142) target = $region28
    $region27: #{stem_forward.3} parent=5 // pred_region
      %s146 = ssub.s32 %s10, 1
      %s147 = smul.u32 8, %s15
      %p148 = scmp.lt.s32.totalorder %s147, 15
      %s149 = scalar_select %p148, %s147, 15
      %s150 = smul.addr %s149, 4
      %s151 = scalar_lea.vmem %s0, %s150
      %p152 = pneg %p36
      %p153 = pneg %p33
      %p154 = pneg %p57
      %p155 = pneg %p54
      %p156 = pneg %p83
      %p157 = pneg %p80
      %s158 = smul.u32 8, %s15
      %p159 = scmp.lt.s32.totalorder %s158, 15
      %s160 = scalar_select %p159, %s158, 15
      %s161 = smul.addr %s160, 4
      %s162 = scalar_lea.vmem %s2, %s161
      %p163 = pneg %p109
      %p164 = pneg %p106
      %p165 = scmp.lt.s32.totalorder %s15, 1
      %s166 = scalar_select %p165, %s15, 1
      %s167 = smul.addr %s166, 2
      %s168 = scalar_lea.vmem %s3, %s167
      %s169 = smul.u32 8, %s15
      %p170 = scmp.lt.s32.totalorder %s169, 15
      %s171 = scalar_select %p170, %s169, 15
      %s172 = smul.addr %s171, 4
      %s173 = scalar_lea.vmem %s0, %s172
      %s174 = smul.u32 8, %s15
      %s175 = smul.u32 8, %s15
      %p176 = scmp.lt.s32.totalorder %s175, 15
      %s177 = scalar_select %p176, %s175, 15
      %s178 = smul.addr %s177, 4
      %s179 = scalar_lea.vmem %s2, %s178
      %s180 = smul.u32 8, %s15
      %p181 = scmp.lt.s32.totalorder %s15, 1
      %s182 = scalar_select %p181, %s15, 1
      %s183 = smul.addr %s182, 2
      %s184 = scalar_lea.vmem %s3, %s183
      %v186 = vld [vmem:[%s173] sm:$0xf]
      %v187 = vld [vmem:[%s173 + $0x4] sm:$0xf]
      %v188 = vld [vmem:[%s173 + $0x8] sm:$0xf]
      %v189 = vld [vmem:[%s173 + $0xc] sm:$0xf]
      %v190 = vld [vmem:[%s173 + $0x10] sm:$0xf]
      %v191 = vld [vmem:[%s173 + $0x14] sm:$0xf]
      %v192 = vld [vmem:[%s173 + $0x18] sm:$0xf]
      %v193 = vld [vmem:[%s173 + $0x1c] sm:$0xf]
      %v194 = vld [vmem:[%s1] sm:$0xf]
      %v195 = vld [vmem:[%s1 + $0x4] sm:$0xf]
      %v196 = vld [vmem:[%s1 + $0x8] sm:$0xf]
      %v197 = vld [vmem:[%s1 + $0xc] sm:$0xf]
      %v198 = vld [vmem:[%s1 + $0x10] sm:$0x3]
      %v207 = vunpack.c.l.b16 %v186
      %v208 = vunpack.c.l.b16 %v187
      %v209 = vunpack.c.l.b16 %v188
      %v210 = vunpack.c.l.b16 %v189
      %v211 = vunpack.c.l.b16 %v190
      %v212 = vunpack.c.l.b16 %v191
      %v213 = vunpack.c.l.b16 %v192
      %v214 = vunpack.c.l.b16 %v193
      %v215 = vpack.c.b16 %v208, %v207
      %v216 = vpack.c.b16 %v210, %v209
      %v217 = vpack.c.b16 %v212, %v211
      %v218 = vpack.c.b16 %v214, %v213
      %v224 = vunpack.c.l.b16 %v194
      %v225 = vunpack.c.l.b16 %v195
      %v226 = vunpack.c.l.b16 %v196
      %v227 = vunpack.c.l.b16 %v197
      %v228 = vunpack.c.l.b16 %v198
      %v229 = vpack.c.b16 %v225, %v224
      %v230 = vpack.c.b16 %v227, %v226
      %v231 = vpack.c.b16 %v228, %v228
      %vm234 = vcmask 293888
      %v236 = vsel %vm234, %v215, 0
      %v239 = vsel %vm234, %v216, 0
      %v242 = vsel %vm234, %v217, 0
      %v245 = vsel %vm234, %v218, 0
      %vm247 = vcmask 1041408
      %v249 = vsel %vm247, %v231, 0
      %251 = vmatprep.subr.bf16.mxu0 0
      %252 = vmatpush1.bf16.msra.mxu0 0
      %253 = vmatprep.subr.bf16.mxu0 0
      %254 = vmatpush1.bf16.msra.mxu0 0
      %255 = vmatprep.subr.bf16.mxu0 0
      %256 = vmatpush1.bf16.msra.mxu0 0
      %257 = vmatprep.subr.bf16.mxu0 0
      %258 = vmatpush1.bf16.msra.mxu0 0
      %259 = vmatprep.subr.bf16.mxu0 0
      %260 = vmatpush1.bf16.msra.mxu0 0
      %261 = vmatprep.subr.bf16.mxu0 0
      %262 = vmatpush1.bf16.msra.mxu0 %v249
      %263 = vmatprep.subr.bf16.mxu0 0
      %264 = vmatpush1.bf16.msra.mxu0 %v230
      %265 = vmatprep.subr.bf16.mxu0 0
      %266 = vmatpush1.bf16.msra.mxu0 %v229
      %267 = vmatprep.subr.bf16.mxu0 0
      %268 = vmatpush2.bf16.msra.mxu0 0
      %269 = vmatprep.subr.bf16.mxu0 0
      %270 = vmatpush2.bf16.msra.mxu0 0
      %271 = vmatprep.subr.bf16.mxu0 0
      %272 = vmatpush2.bf16.msra.mxu0 0
      %273 = vmatprep.subr.bf16.mxu0 0
      %274 = vmatpush2.bf16.msra.mxu0 0
      %275 = vmatprep.subr.bf16.mxu0 0
      %276 = vmatpush2.bf16.msra.mxu0 0
      %277 = vmatprep.subr.bf16.mxu0 0
      %278 = vmatpush2.bf16.msra.mxu0 0
      %279 = vmatprep.subr.bf16.mxu0 0
      %280 = vmatpush2.bf16.msra.mxu0 0
      %281 = vmatprep.subr.bf16.mxu0 0
      %282 = vmatpush2.bf16.msra.mxu0 0
      %283 = vmatprep.mubr.bf16.mxu0 0
      %284 = vmatmul.mubr.bf16.gmra.mxu0 %v236
      %v285 = vpop.f32.mrf.mxu0
      %v286 = vadd.f32 0.0, %v285
      %v287 = vpop.f32.mrf.mxu0
      %v288 = vpop.f32.mrf.mxu0
      %v289 = vadd.f32 0.0, %v288
      %v290 = vpop.f32.mrf.mxu0
      %291 = vmatprep.mubr.bf16.mxu0 0
      %292 = vmatmul.mubr.bf16.gmra.mxu0 %v239
      %v293 = vpop.f32.mrf.mxu0
      %v294 = vadd.f32 0.0, %v293
      %v295 = vpop.f32.mrf.mxu0
      %v296 = vpop.f32.mrf.mxu0
      %v297 = vadd.f32 0.0, %v296
      %v298 = vpop.f32.mrf.mxu0
      %299 = vmatprep.mubr.bf16.mxu0 0
      %300 = vmatmul.mubr.bf16.gmra.mxu0 %v242
      %v301 = vpop.f32.mrf.mxu0
      %v302 = vadd.f32 0.0, %v301
      %v303 = vpop.f32.mrf.mxu0
      %v304 = vpop.f32.mrf.mxu0
      %v305 = vadd.f32 0.0, %v304
      %v306 = vpop.f32.mrf.mxu0
      %307 = vmatprep.mubr.bf16.mxu0 0
      %308 = vmatmul.mubr.bf16.gmra.mxu0 %v245
      %v309 = vpop.f32.mrf.mxu0
      %v310 = vadd.f32 0.0, %v309
      %v311 = vpop.f32.mrf.mxu0
      %v312 = vpop.f32.mrf.mxu0
      %v313 = vadd.f32 0.0, %v312
      %v314 = vpop.f32.mrf.mxu0
      %315 = vdwg.mxu0
      %v316 = vpack.c.bf16 %v289, %v286
      %v317 = vpack.c.bf16 %v297, %v294
      %v318 = vpack.c.bf16 %v305, %v302
      %v319 = vpack.c.bf16 %v313, %v310
      %v324 = vunpack.c.l.b16 %v316
      %v325 = vunpack.c.h.b16 %v316
      %v326 = vunpack.c.l.b16 %v317
      %v327 = vunpack.c.h.b16 %v317
      %v328 = vunpack.c.l.b16 %v318
      %v329 = vunpack.c.h.b16 %v318
      %v330 = vunpack.c.l.b16 %v319
      %v331 = vunpack.c.h.b16 %v319
      %v332 = vpack.c.b16 %v324, %v324
      %v333 = vpack.c.b16 %v325, %v325
      %v334 = vpack.c.b16 %v326, %v326
      %v335 = vpack.c.b16 %v327, %v327
      %v336 = vpack.c.b16 %v328, %v328
      %v337 = vpack.c.b16 %v329, %v329
      %v338 = vpack.c.b16 %v330, %v330
      %v339 = vpack.c.b16 %v331, %v331
      %vm348 = vcmask 125952
      %349 = vst.msk [vmem:[%s179] sm:$0xf] %vm348, %v332
      %350 = vst.msk [vmem:[%s179 + $0x4] sm:$0xf] %vm348, %v333
      %351 = vst.msk [vmem:[%s179 + $0x8] sm:$0xf] %vm348, %v334
      %352 = vst.msk [vmem:[%s179 + $0xc] sm:$0xf] %vm348, %v335
      %353 = vst.msk [vmem:[%s179 + $0x10] sm:$0xf] %vm348, %v336
      %354 = vst.msk [vmem:[%s179 + $0x14] sm:$0xf] %vm348, %v337
      %355 = vst.msk [vmem:[%s179 + $0x18] sm:$0xf] %vm348, %v338
      %356 = vst.msk [vmem:[%s179 + $0x1c] sm:$0xf] %vm348, %v339
      %s357 = smul.u32 %s15, 64
      %v358 = vlaneseq
      %v359 = vshrl.u32 %v358, 7
      %v360 = vadd.s32 %v359, 8
      %v361 = vadd.s32 %v359, 16
      %v362 = vadd.s32 %v359, 24
      %v363 = vadd.s32 %v359, 32
      %v364 = vadd.s32 %v359, 40
      %v365 = vadd.s32 %v359, 48
      %v366 = vadd.s32 %v359, 56
      %v367 = vstv %s357
      %v368 = vadd.s32 %v359, %v367
      %v369 = vadd.s32 %v360, %v367
      %v370 = vadd.s32 %v361, %v367
      %v371 = vadd.s32 %v362, %v367
      %v372 = vadd.s32 %v363, %v367
      %v373 = vadd.s32 %v364, %v367
      %v374 = vadd.s32 %v365, %v367
      %v375 = vadd.s32 %v366, %v367
      %vm376 = vcmp.lt.s32.totalorder %v368, 128
      %vm377 = vcmp.lt.s32.totalorder %v369, 128
      %vm378 = vcmp.lt.s32.totalorder %v370, 128
      %vm379 = vcmp.lt.s32.totalorder %v371, 128
      %vm380 = vcmp.lt.s32.totalorder %v372, 128
      %vm381 = vcmp.lt.s32.totalorder %v373, 128
      %vm382 = vcmp.lt.s32.totalorder %v374, 128
      %vm383 = vcmp.lt.s32.totalorder %v375, 128
      %v384 = vsel %vm376, 1, 0
      %v385 = vsel %vm377, 1, 0
      %v386 = vsel %vm378, 1, 0
      %v387 = vsel %vm379, 1, 0
      %v388 = vsel %vm380, 1, 0
      %v389 = vsel %vm381, 1, 0
      %v390 = vsel %vm382, 1, 0
      %v391 = vsel %vm383, 1, 0
      %v392 = vcvt.s32.f32 %v384
      %v393 = vcvt.s32.f32 %v385
      %v394 = vcvt.s32.f32 %v386
      %v395 = vcvt.s32.f32 %v387
      %v396 = vcvt.s32.f32 %v388
      %v397 = vcvt.s32.f32 %v389
      %v398 = vcvt.s32.f32 %v390
      %v399 = vcvt.s32.f32 %v391
      %s400 = ssub.s32 128, %s357
      %p401 = scmp.lt.s32.totalorder %s400, 64
      %s402 = scalar_select %p401, %s400, 64
      %s403 = scvt.s32.f32 %s402
      %vm404 = vcmask 130048
      %v405 = vsel %vm404, %v286, 0.0
      %v406 = vsel %vm404, %v289, 0.0
      %v407 = vadd.f32 %v405, %v406
      %v408 = vsel %vm404, %v294, 0.0
      %v409 = vadd.f32 %v407, %v408
      %v410 = vsel %vm404, %v297, 0.0
      %v411 = vadd.f32 %v409, %v410
      %v412 = vsel %vm404, %v302, 0.0
      %v413 = vadd.f32 %v411, %v412
      %v414 = vsel %vm404, %v305, 0.0
      %v415 = vadd.f32 %v413, %v414
      %v416 = vsel %vm404, %v310, 0.0
      %v417 = vadd.f32 %v415, %v416
      %v418 = vsel %vm404, %v313, 0.0
      %v419 = vadd.f32 %v417, %v418
      %v420 = vrot.slane %v419, 4
      %v421 = vadd.f32 %v419, %v420
      %v422 = vrot.slane %v421, 2
      %v423 = vadd.f32 %v421, %v422
      %v424 = vrot.slane %v423, 1
      %v425 = vadd.f32 %v423, %v424
      %v426 = vstv %s403
      %v427 = vrcp.pop %v426
      %v428 = vmul.f32 %v425, %v427
      %v429 = vsub.f32 %v286, %v428
      %v430 = vsub.f32 %v289, %v428
      %v431 = vsub.f32 %v294, %v428
      %v432 = vsub.f32 %v297, %v428
      %v433 = vsub.f32 %v302, %v428
      %v434 = vsub.f32 %v305, %v428
      %v435 = vsub.f32 %v310, %v428
      %v436 = vsub.f32 %v313, %v428
      %v437 = vmul.f32 %v429, %v392
      %v438 = vmul.f32 %v430, %v393
      %v439 = vmul.f32 %v431, %v394
      %v440 = vmul.f32 %v432, %v395
      %v441 = vmul.f32 %v433, %v396
      %v442 = vmul.f32 %v434, %v397
      %v443 = vmul.f32 %v435, %v398
      %v444 = vmul.f32 %v436, %v399
      %v445 = vmul.f32 %v437, %v437
      %v446 = vmul.f32 %v438, %v438
      %v447 = vmul.f32 %v439, %v439
      %v448 = vmul.f32 %v440, %v440
      %v449 = vmul.f32 %v441, %v441
      %v450 = vmul.f32 %v442, %v442
      %v451 = vmul.f32 %v443, %v443
      %v452 = vmul.f32 %v444, %v444
      %v453 = vsel %vm404, %v445, 0.0
      %v454 = vsel %vm404, %v446, 0.0
      %v455 = vadd.f32 %v453, %v454
      %v456 = vsel %vm404, %v447, 0.0
      %v457 = vadd.f32 %v455, %v456
      %v458 = vsel %vm404, %v448, 0.0
      %v459 = vadd.f32 %v457, %v458
      %v460 = vsel %vm404, %v449, 0.0
      %v461 = vadd.f32 %v459, %v460
      %v462 = vsel %vm404, %v450, 0.0
      %v463 = vadd.f32 %v461, %v462
      %v464 = vsel %vm404, %v451, 0.0
      %v465 = vadd.f32 %v463, %v464
      %v466 = vsel %vm404, %v452, 0.0
      %v467 = vadd.f32 %v465, %v466
      %v468 = vrot.slane %v467, 4
      %v469 = vadd.f32 %v467, %v468
      %v470 = vrot.slane %v469, 2
      %v471 = vadd.f32 %v469, %v470
      %v472 = vrot.slane %v471, 1
      %v473 = vadd.f32 %v471, %v472
      %vm474 = vcmask 1040384
      %v475 = vsel %vm474, %v425, %v473
      %vm476 = vcmask 123904
      %477 = vst.msk [vmem:[%s184] sm:$0x3] %vm476, %v475
      %s478 = smul.u32 8, %s15
      %p479 = scmp.lt.s32.totalorder %s478, 15
      %s480 = scalar_select %p479, %s478, 15
      %s481 = smul.addr %s480, 4
      %s482 = scalar_lea.vmem %s2, %s481
      %p483 = scmp.lt.s32.totalorder %s15, 1
      %s484 = scalar_select %p483, %s15, 1
      %s485 = smul.addr %s484, 2
      %s486 = scalar_lea.vmem %s3, %s485
      // Predicated region
      $region29: #{stem_forward.3} parent=27 // pred_check
        %p487 = pneg %p80
      $region30: #{stem_forward.3} parent=27 // pred_check_branch
        %489 = sbr.rel (%p487) target = $region32
      $region31: #{stem_forward.3} parent=27 // pred_region
        %s490 = smul.u32 8, %s15
      $region32: #{stem_forward.3} parent=27 // pred_fallthru
        _
      // Predicated region
      $region33: #{stem_forward.3} parent=27 // pred_check
        %p491 = pneg %p106
      $region34: #{stem_forward.3} parent=27 // pred_check_branch
        %493 = sbr.rel (%p491) target = $region36
      $region35: #{stem_forward.3} parent=27 // pred_region
        _
      $region36: #{stem_forward.3} parent=27 // pred_fallthru
        _
    $region28: #{stem_forward.3} parent=5 // pred_fallthru
      _
    %p494 = scmp.le.s32.totalorder 2, %s10
    // Predicated region
    $region37: #{stem_forward.3} parent=5 // pred_check
      %p495 = pneg %p494
    $region38: #{stem_forward.3} parent=5 // pred_check_branch
      %497 = sbr.rel (%p495) target = $region40
    $region39: #{stem_forward.3} parent=5 // pred_region
      %s498 = ssub.s32 %s10, 2
      // Predicated region
      $region41: #{stem_forward.3} parent=39 // pred_check
        %p499 = pneg %p86
      $region42: #{stem_forward.3} parent=39 // pred_check_branch
        %501 = sbr.rel (%p499) target = $region44
      $region43: #{stem_forward.3} parent=39 // pred_region
        %s502 = smul.u32 8, %s16
        %p503 = scmp.lt.s32.totalorder %s502, 15
        %s504 = scalar_select %p503, %s502, 15
        %s505 = smul.addr %s504, 4
        %s506 = scalar_lea.vmem %s2, %s505
      $region44: #{stem_forward.3} parent=39 // pred_fallthru
        _
      // Predicated region
      $region45: #{stem_forward.3} parent=39 // pred_check
        %p507 = pneg %p112
      $region46: #{stem_forward.3} parent=39 // pred_check_branch
        %509 = sbr.rel (%p507) target = $region48
      $region47: #{stem_forward.3} parent=39 // pred_region
        %p510 = scmp.lt.s32.totalorder %s16, 1
        %s511 = scalar_select %p510, %s16, 1
        %s512 = smul.addr %s511, 2
        %s513 = scalar_lea.vmem %s3, %s512
      $region48: #{stem_forward.3} parent=39 // pred_fallthru
        _
    $region40: #{stem_forward.3} parent=5 // pred_fallthru
      _
  $region6: #{stem_forward.3} parent=0 // loop_footer
    %s14 = sadd.s32 1, %s10
  $region7: #{stem_forward.3} parent=0 // loop_footer_branch
    %9 = sbr.rel target = $region3
  $region8: #{stem_forward.3} parent=0 // loop_exit
    _

// kernel: stem_forward.4
$region0: #{stem_forward.4}
  #allocation0 [shape = 'u32[]', space=smem, size = 0x4, offset = 0x4, fixed_abs, tag = 'smem constant byte address 0x4 - core index']
  #allocation1 [shape = 'u32[144,128]{1,0:T(1,128)}', space=vmem, size = 0x12000, scoped, tag = 'internal scratch']
  %s0 = inlined_call_operand.vmem [shape: bf16[32,144], index: 0, kind: input, shape index: {}]
  %s1 = inlined_call_operand.vmem [shape: bf16[144,128], index: 1, kind: input, shape index: {}]
  %s2 = inlined_call_operand.vmem [shape: bf16[32,32], index: 2, kind: output, shape index: {0}]
  %s3 = inlined_call_operand.vmem [shape: f32[2,2,32], index: 3, kind: output, shape index: {1}]
  %4 = xla_tuple %s2, %s3
  %s5 = sld [smem:[#allocation0]]
  $region49: #{stem_forward.4} parent=0
    _
  %s7 = ssub.s32 1, %s5
  %s8 = scalar_select 0, %s7, %s5
  loop: start=0, step=1, limit=4
  $region2: #{stem_forward.4} parent=0 // loop_pre_header
    _
  $region3: #{stem_forward.4} parent=0 // loop_header
    %s10 = sphi 0, %s14
    %p11 = scmp.ge.s32.totalorder %s10, 4
    %s20 = sphi 0, %s22
    %s23 = sphi 0, %s20
    %s24 = sphi 0, %s23
    %s40 = sphi 0, %s24
    %s44 = sphi 0, %s44
    %s46 = sphi 0, %s44
    %s47 = sphi 0, %s46
    %s61 = sphi 0, %s47
    %s67 = sphi 0, %s69
    %s70 = sphi 0, %s67
    %s71 = sphi 0, %s70
    %s87 = sphi 0, %s71
    %s93 = sphi 0, %s95
    %s96 = sphi 0, %s93
    %s97 = sphi 0, %s96
    %s113 = sphi 0, %s97
  $region4: #{stem_forward.4} parent=0 // loop_header_branch
    %13 = sbr.rel (%p11) target = $region8
  $region5: #{stem_forward.4} parent=0 // loop_body
    %s15 = ssub.s32 %s10, 1
    %s16 = ssub.s32 %s10, 2
    %s17 = sadd.s32 %s10, 1
    %s18 = ssub.s32 %s10, %s17
    %p19 = scmp.eq.s32.totalorder %s18, 0
    %s21 = sadd.s32 %s20, 1
    %s22 = scalar_select %p19, %s20, %s21
    %p25 = pneg %p19
    %p26 = scmp.eq.s32.totalorder %s10, 1
    %p27 = por %p25, %p26
    %p28 = scmp.ne.s32.totalorder %s20, %s23
    %p29 = scmp.eq.s32.totalorder %s10, 0
    %p30 = por %p28, %p29
    %p31 = scmp.ne.s32.totalorder %s20, %s23
    %p32 = scmp.eq.s32.totalorder %s15, 1
    %p33 = por %p31, %p32
    %p34 = scmp.ne.s32.totalorder %s23, %s24
    %p35 = scmp.eq.s32.totalorder %s15, 0
    %p36 = por %p34, %p35
    %p37 = scmp.ne.s32.totalorder %s23, %s24
    %p38 = scmp.eq.s32.totalorder %s16, 1
    %p39 = por %p37, %p38
    %p41 = scmp.ne.s32.totalorder %s24, %s40
    %p42 = scmp.eq.s32.totalorder %s16, 0
    %p43 = por %p41, %p42
    %s45 = sadd.s32 %s44, 1
    %p48 = scmp.eq.s32.totalorder %s10, 1
    %p49 = scmp.ne.s32.totalorder %s44, %s46
    %p50 = scmp.eq.s32.totalorder %s10, 0
    %p51 = por %p49, %p50
    %p52 = scmp.ne.s32.totalorder %s44, %s46
    %p53 = scmp.eq.s32.totalorder %s15, 1
    %p54 = por %p52, %p53
    %p55 = scmp.ne.s32.totalorder %s46, %s47
    %p56 = scmp.eq.s32.totalorder %s15, 0
    %p57 = por %p55, %p56
    %p58 = scmp.ne.s32.totalorder %s46, %s47
    %p59 = scmp.eq.s32.totalorder %s16, 1
    %p60 = por %p58, %p59
    %p62 = scmp.ne.s32.totalorder %s47, %s61
    %p63 = scmp.eq.s32.totalorder %s16, 0
    %p64 = por %p62, %p63
    %s65 = ssub.s32 %s10, %s17
    %p66 = scmp.eq.s32.totalorder %s65, 0
    %s68 = sadd.s32 %s67, 1
    %s69 = scalar_select %p66, %s67, %s68
    %p72 = pneg %p66
    %p73 = scmp.eq.s32.totalorder %s10, 1
    %p74 = por %p72, %p73
    %p75 = scmp.ne.s32.totalorder %s67, %s70
    %p76 = scmp.eq.s32.totalorder %s10, 0
    %p77 = por %p75, %p76
    %p78 = scmp.ne.s32.totalorder %s67, %s70
    %p79 = scmp.eq.s32.totalorder %s15, 1
    %p80 = por %p78, %p79
    %p81 = scmp.ne.s32.totalorder %s70, %s71
    %p82 = scmp.eq.s32.totalorder %s15, 0
    %p83 = por %p81, %p82
    %p84 = scmp.ne.s32.totalorder %s70, %s71
    %p85 = scmp.eq.s32.totalorder %s16, 1
    %p86 = por %p84, %p85
    %p88 = scmp.ne.s32.totalorder %s71, %s87
    %p89 = scmp.eq.s32.totalorder %s16, 0
    %p90 = por %p88, %p89
    %s91 = ssub.s32 %s10, %s17
    %p92 = scmp.eq.s32.totalorder %s91, 0
    %s94 = sadd.s32 %s93, 1
    %s95 = scalar_select %p92, %s93, %s94
    %p98 = pneg %p92
    %p99 = scmp.eq.s32.totalorder %s10, 1
    %p100 = por %p98, %p99
    %p101 = scmp.ne.s32.totalorder %s93, %s96
    %p102 = scmp.eq.s32.totalorder %s10, 0
    %p103 = por %p101, %p102
    %p104 = scmp.ne.s32.totalorder %s93, %s96
    %p105 = scmp.eq.s32.totalorder %s15, 1
    %p106 = por %p104, %p105
    %p107 = scmp.ne.s32.totalorder %s96, %s97
    %p108 = scmp.eq.s32.totalorder %s15, 0
    %p109 = por %p107, %p108
    %p110 = scmp.ne.s32.totalorder %s96, %s97
    %p111 = scmp.eq.s32.totalorder %s16, 1
    %p112 = por %p110, %p111
    %p114 = scmp.ne.s32.totalorder %s97, %s113
    %p115 = scmp.eq.s32.totalorder %s16, 0
    %p116 = por %p114, %p115
    %p117 = scmp.le.s32.totalorder 1, %s10
    %p118 = scmp.lt.s32.totalorder %s10, 3
    %p119 = pnand %p117, %p118
    %p120 = pneg %p119
    // Predicated region
    $region9: #{stem_forward.4} parent=5 // pred_check
      _
    $region10: #{stem_forward.4} parent=5 // pred_check_branch
      %122 = sbr.rel (%p119) target = $region12
    $region11: #{stem_forward.4} parent=5 // pred_region
      %s123 = ssub.s32 %s10, 1
      // Predicated region
      $region13: #{stem_forward.4} parent=11 // pred_check
        %p124 = pneg %p57
      $region14: #{stem_forward.4} parent=11 // pred_check_branch
        %126 = sbr.rel (%p124) target = $region16
      $region15: #{stem_forward.4} parent=11 // pred_region
        _
      $region16: #{stem_forward.4} parent=11 // pred_fallthru
        _
    $region12: #{stem_forward.4} parent=5 // pred_fallthru
      _
    %p127 = scmp.lt.s32.totalorder %s10, 2
    // Predicated region
    $region17: #{stem_forward.4} parent=5 // pred_check
      %p128 = pneg %p127
    $region18: #{stem_forward.4} parent=5 // pred_check_branch
      %130 = sbr.rel (%p128) target = $region20
    $region19: #{stem_forward.4} parent=5 // pred_region
      // Predicated region
      $region21: #{stem_forward.4} parent=19 // pred_check
        %p131 = pneg %p30
      $region22: #{stem_forward.4} parent=19 // pred_check_branch
        %133 = sbr.rel (%p131) target = $region24
      $region23: #{stem_forward.4} parent=19 // pred_region
        %s134 = smul.u32 2, %s10
        %p135 = scmp.lt.s32.totalorder %s134, 3
        %s136 = scalar_select %p135, %s134, 3
        %s137 = smul.addr %s136, 2
        %s138 = smul.addr %s137, 4
        %s139 = scalar_lea.vmem %s0, %s138
        %s140 = smul.u32 2, %s10
      $region24: #{stem_forward.4} parent=19 // pred_fallthru
        _
    $region20: #{stem_forward.4} parent=5 // pred_fallthru
      _
    %p141 = scmp.le.s32.totalorder 1, %s10
    %p142 = scmp.lt.s32.totalorder %s10, 3
    %p143 = pnand %p141, %p142
    %p144 = pneg %p143
    // Predicated region
    $region25: #{stem_forward.4} parent=5 // pred_check
      _
    $region26: #{stem_forward.4} parent=5 // pred_check_branch
      %146 = sbr.rel (%p143) target = $region28
    $region27: #{stem_forward.4} parent=5 // pred_region
      %s147 = ssub.s32 %s10, 1
      %s148 = smul.u32 2, %s15
      %p149 = scmp.lt.s32.totalorder %s148, 3
      %s150 = scalar_select %p149, %s148, 3
      %s151 = smul.addr %s150, 2
      %s152 = smul.addr %s151, 4
      %s153 = scalar_lea.vmem %s0, %s152
      %p154 = pneg %p36
      %p155 = pneg %p33
      %p156 = pneg %p57
      %p157 = pneg %p54
      %p158 = pneg %p83
      %p159 = pneg %p80
      %s160 = smul.u32 2, %s15
      %p161 = scmp.lt.s32.totalorder %s160, 3
      %s162 = scalar_select %p161, %s160, 3
      %s163 = smul.addr %s162, 4
      %s164 = scalar_lea.vmem %s2, %s163
      %p165 = pneg %p109
      %p166 = pneg %p106
      %p167 = scmp.lt.s32.totalorder %s15, 1
      %s168 = scalar_select %p167, %s15, 1
      %s169 = smul.addr %s168, 2
      %s170 = scalar_lea.vmem %s3, %s169
      %s171 = smul.u32 2, %s15
      %p172 = scmp.lt.s32.totalorder %s171, 3
      %s173 = scalar_select %p172, %s171, 3
      %s174 = smul.addr %s173, 2
      %s175 = smul.addr %s174, 4
      %s176 = scalar_lea.vmem %s0, %s175
      %s177 = smul.u32 2, %s15
      %s178 = smul.u32 2, %s15
      %p179 = scmp.lt.s32.totalorder %s178, 3
      %s180 = scalar_select %p179, %s178, 3
      %s181 = smul.addr %s180, 4
      %s182 = scalar_lea.vmem %s2, %s181
      %s183 = smul.u32 2, %s15
      %p184 = scmp.lt.s32.totalorder %s15, 1
      %s185 = scalar_select %p184, %s15, 1
      %s186 = smul.addr %s185, 2
      %s187 = scalar_lea.vmem %s3, %s186
      %v189 = vld [vmem:[%s176] sm:$0xff]
      %v190 = vld [vmem:[%s176 + $0x8] sm:$0xff]
      %v191 = vld [vmem:[%s1] sm:$0xf]
      %v192 = vld [vmem:[%s1 + $0x4] sm:$0xf]
      %v193 = vld [vmem:[%s1 + $0x8] sm:$0xf]
      %v194 = vld [vmem:[%s1 + $0xc] sm:$0xf]
      %v195 = vld [vmem:[%s1 + $0x10] sm:$0xf]
      %v196 = vld [vmem:[%s1 + $0x14] sm:$0xf]
      %v197 = vld [vmem:[%s1 + $0x18] sm:$0xf]
      %v198 = vld [vmem:[%s1 + $0x1c] sm:$0xf]
      %v199 = vld [vmem:[%s1 + $0x20] sm:$0xf]
      %v200 = vld [vmem:[%s1 + $0x24] sm:$0xf]
      %v201 = vld [vmem:[%s1 + $0x28] sm:$0xf]
      %v202 = vld [vmem:[%s1 + $0x2c] sm:$0xf]
      %v203 = vld [vmem:[%s1 + $0x30] sm:$0xf]
      %v204 = vld [vmem:[%s1 + $0x34] sm:$0xf]
      %v205 = vld [vmem:[%s1 + $0x38] sm:$0xf]
      %v206 = vld [vmem:[%s1 + $0x3c] sm:$0xf]
      %v207 = vld [vmem:[%s1 + $0x40] sm:$0xf]
      %v208 = vld [vmem:[%s1 + $0x44] sm:$0xf]
      %v211 = vunpack.c.l.b16 %v189
      %v212 = vunpack.c.h.b16 %v189
      %v213 = vunpack.c.l.b16 %v190
      %v214 = vunpack.c.h.b16 %v190
      %v215 = vpack.c.b16 %v213, %v211
      %v216 = vpack.c.b16 %v214, %v212
      %v236 = vunpack.c.l.b16 %v191
      %v237 = vunpack.c.l.b16 %v192
      %v238 = vunpack.c.l.b16 %v193
      %v239 = vunpack.c.l.b16 %v194
      %v240 = vunpack.c.l.b16 %v195
      %v241 = vunpack.c.l.b16 %v196
      %v242 = vunpack.c.l.b16 %v197
      %v243 = vunpack.c.l.b16 %v198
      %v244 = vunpack.c.l.b16 %v199
      %v245 = vunpack.c.l.b16 %v200
      %v246 = vunpack.c.l.b16 %v201
      %v247 = vunpack.c.l.b16 %v202
      %v248 = vunpack.c.l.b16 %v203
      %v249 = vunpack.c.l.b16 %v204
      %v250 = vunpack.c.l.b16 %v205
      %v251 = vunpack.c.l.b16 %v206
      %v252 = vunpack.c.l.b16 %v207
      %v253 = vunpack.c.l.b16 %v208
      %v254 = vpack.c.b16 %v237, %v236
      %v255 = vpack.c.b16 %v239, %v238
      %v256 = vpack.c.b16 %v241, %v240
      %v257 = vpack.c.b16 %v243, %v242
      %v258 = vpack.c.b16 %v245, %v244
      %v259 = vpack.c.b16 %v247, %v246
      %v260 = vpack.c.b16 %v249, %v248
      %v261 = vpack.c.b16 %v251, %v250
      %v262 = vpack.c.b16 %v253, %v252
      %vm272 = vcmask 130048
      %v274 = vsel %vm272, %v216, 0
      %276 = vmatprep.subr.bf16.mxu0 0
      %277 = vmatpush1.bf16.msra.mxu0 %v261
      %278 = vmatprep.subr.bf16.mxu0 0
      %279 = vmatpush1.bf16.msra.mxu0 %v260
      %280 = vmatprep.subr.bf16.mxu0 0
      %281 = vmatpush1.bf16.msra.mxu0 %v259
      %282 = vmatprep.subr.bf16.mxu0 0
      %283 = vmatpush1.bf16.msra.mxu0 %v258
      %284 = vmatprep.subr.bf16.mxu0 0
      %285 = vmatpush1.bf16.msra.mxu0 %v257
      %286 = vmatprep.subr.bf16.mxu0 0
      %287 = vmatpush1.bf16.msra.mxu0 %v256
      %288 = vmatprep.subr.bf16.mxu0 0
      %289 = vmatpush1.bf16.msra.mxu0 %v255
      %290 = vmatprep.subr.bf16.mxu0 0
      %291 = vmatpush1.bf16.msra.mxu0 %v254
      %292 = vmatprep.subr.bf16.mxu0 0
      %293 = vmatpush2.bf16.msra.mxu0 0
      %294 = vmatprep.subr.bf16.mxu0 0
      %295 = vmatpush2.bf16.msra.mxu0 0
      %296 = vmatprep.subr.bf16.mxu0 0
      %297 = vmatpush2.bf16.msra.mxu0 0
      %298 = vmatprep.subr.bf16.mxu0 0
      %299 = vmatpush2.bf16.msra.mxu0 0
      %300 = vmatprep.subr.bf16.mxu0 0
      %301 = vmatpush2.bf16.msra.mxu0 0
      %302 = vmatprep.subr.bf16.mxu0 0
      %303 = vmatpush2.bf16.msra.mxu0 0
      %304 = vmatprep.subr.bf16.mxu0 0
      %305 = vmatpush2.bf16.msra.mxu0 0
      %306 = vmatprep.subr.bf16.mxu0 0
      %307 = vmatpush2.bf16.msra.mxu0 %v262
      %308 = vmatprep.mubr.bf16.mxu0 %v274
      %309 = vmatmul.mubr.bf16.gmra.mxu0 %v215
      %v310 = vpop.f32.mrf.mxu0
      %v311 = vadd.f32 0.0, %v310
      %v312 = vpop.f32.mrf.mxu0
      %v313 = vpop.f32.mrf.mxu0
      %v314 = vadd.f32 0.0, %v313
      %v315 = vpop.f32.mrf.mxu0
      %316 = vdwg.mxu0
      %v317 = vpack.c.bf16 %v314, %v311
      %v319 = vunpack.c.l.b16 %v317
      %v320 = vunpack.c.h.b16 %v317
      %v321 = vpack.c.b16 %v319, %v319
      %v322 = vpack.c.b16 %v320, %v320
      %vm325 = vcmask 257024
      %326 = vst.msk [vmem:[%s182] sm:$0xf] %vm325, %v321
      %327 = vst.msk [vmem:[%s182 + $0x4] sm:$0xf] %vm325, %v322
      %s328 = smul.u32 %s15, 16
      %v329 = vlaneseq
      %v330 = vshrl.u32 %v329, 7
      %v331 = vadd.s32 %v330, 8
      %v332 = vstv %s328
      %v333 = vadd.s32 %v330, %v332
      %v334 = vadd.s32 %v331, %v332
      %vm335 = vcmp.lt.s32.totalorder %v333, 32
      %vm336 = vcmp.lt.s32.totalorder %v334, 32
      %v337 = vsel %vm335, 1, 0
      %v338 = vsel %vm336, 1, 0
      %v339 = vcvt.s32.f32 %v337
      %v340 = vcvt.s32.f32 %v338
      %s341 = ssub.s32 32, %s328
      %p342 = scmp.lt.s32.totalorder %s341, 16
      %s343 = scalar_select %p342, %s341, 16
      %s344 = scvt.s32.f32 %s343
      %vm345 = vcmask 261120
      %v346 = vsel %vm345, %v311, 0.0
      %v347 = vsel %vm345, %v314, 0.0
      %v348 = vadd.f32 %v346, %v347
      %v349 = vrot.slane %v348, 4
      %v350 = vadd.f32 %v348, %v349
      %v351 = vrot.slane %v350, 2
      %v352 = vadd.f32 %v350, %v351
      %v353 = vrot.slane %v352, 1
      %v354 = vadd.f32 %v352, %v353
      %v355 = vstv %s344
      %v356 = vrcp.pop %v355
      %v357 = vmul.f32 %v354, %v356
      %v358 = vsub.f32 %v311, %v357
      %v359 = vsub.f32 %v314, %v357
      %v360 = vmul.f32 %v358, %v339
      %v361 = vmul.f32 %v359, %v340
      %v362 = vmul.f32 %v360, %v360
      %v363 = vmul.f32 %v361, %v361
      %v364 = vsel %vm345, %v362, 0.0
      %v365 = vsel %vm345, %v363, 0.0
      %v366 = vadd.f32 %v364, %v365
      %v367 = vrot.slane %v366, 4
      %v368 = vadd.f32 %v366, %v367
      %v369 = vrot.slane %v368, 2
      %v370 = vadd.f32 %v368, %v369
      %v371 = vrot.slane %v370, 1
      %v372 = vadd.f32 %v370, %v371
      %vm373 = vcmask 1040384
      %v374 = vsel %vm373, %v354, %v372
      %vm375 = vcmask 254976
      %376 = vst.msk [vmem:[%s187] sm:$0x3] %vm375, %v374
      %s377 = smul.u32 2, %s15
      %p378 = scmp.lt.s32.totalorder %s377, 3
      %s379 = scalar_select %p378, %s377, 3
      %s380 = smul.addr %s379, 4
      %s381 = scalar_lea.vmem %s2, %s380
      %p382 = scmp.lt.s32.totalorder %s15, 1
      %s383 = scalar_select %p382, %s15, 1
      %s384 = smul.addr %s383, 2
      %s385 = scalar_lea.vmem %s3, %s384
      // Predicated region
      $region29: #{stem_forward.4} parent=27 // pred_check
        %p386 = pneg %p80
      $region30: #{stem_forward.4} parent=27 // pred_check_branch
        %388 = sbr.rel (%p386) target = $region32
      $region31: #{stem_forward.4} parent=27 // pred_region
        %s389 = smul.u32 2, %s15
      $region32: #{stem_forward.4} parent=27 // pred_fallthru
        _
      // Predicated region
      $region33: #{stem_forward.4} parent=27 // pred_check
        %p390 = pneg %p106
      $region34: #{stem_forward.4} parent=27 // pred_check_branch
        %392 = sbr.rel (%p390) target = $region36
      $region35: #{stem_forward.4} parent=27 // pred_region
        _
      $region36: #{stem_forward.4} parent=27 // pred_fallthru
        _
    $region28: #{stem_forward.4} parent=5 // pred_fallthru
      _
    %p393 = scmp.le.s32.totalorder 2, %s10
    // Predicated region
    $region37: #{stem_forward.4} parent=5 // pred_check
      %p394 = pneg %p393
    $region38: #{stem_forward.4} parent=5 // pred_check_branch
      %396 = sbr.rel (%p394) target = $region40
    $region39: #{stem_forward.4} parent=5 // pred_region
      %s397 = ssub.s32 %s10, 2
      // Predicated region
      $region41: #{stem_forward.4} parent=39 // pred_check
        %p398 = pneg %p86
      $region42: #{stem_forward.4} parent=39 // pred_check_branch
        %400 = sbr.rel (%p398) target = $region44
      $region43: #{stem_forward.4} parent=39 // pred_region
        %s401 = smul.u32 2, %s16
        %p402 = scmp.lt.s32.totalorder %s401, 3
        %s403 = scalar_select %p402, %s401, 3
        %s404 = smul.addr %s403, 4
        %s405 = scalar_lea.vmem %s2, %s404
      $region44: #{stem_forward.4} parent=39 // pred_fallthru
        _
      // Predicated region
      $region45: #{stem_forward.4} parent=39 // pred_check
        %p406 = pneg %p112
      $region46: #{stem_forward.4} parent=39 // pred_check_branch
        %408 = sbr.rel (%p406) target = $region48
      $region47: #{stem_forward.4} parent=39 // pred_region
        %p409 = scmp.lt.s32.totalorder %s16, 1
        %s410 = scalar_select %p409, %s16, 1
        %s411 = smul.addr %s410, 2
        %s412 = scalar_lea.vmem %s3, %s411
      $region48: #{stem_forward.4} parent=39 // pred_fallthru
        _
    $region40: #{stem_forward.4} parent=5 // pred_fallthru
      _
  $region6: #{stem_forward.4} parent=0 // loop_footer
    %s14 = sadd.s32 1, %s10
  $region7: #{stem_forward.4} parent=0 // loop_footer_branch
    %9 = sbr.rel target = $region3
  $region8: #{stem_forward.4} parent=0 // loop_exit
    _

// kernel: stem_forward.5
$region0: #{stem_forward.5}
  #allocation0 [shape = 'u32[]', space=smem, size = 0x4, offset = 0x4, fixed_abs, tag = 'smem constant byte address 0x4 - core index']
  #allocation1 [shape = 'u32[144,128]{1,0:T(1,128)}', space=vmem, size = 0x12000, scoped, tag = 'internal scratch']
  %s0 = inlined_call_operand.vmem [shape: bf16[32,288], index: 0, kind: input, shape index: {}]
  %s1 = inlined_call_operand.vmem [shape: bf16[288,128], index: 1, kind: input, shape index: {}]
  %s2 = inlined_call_operand.vmem [shape: bf16[32,32], index: 2, kind: output, shape index: {0}]
  %s3 = inlined_call_operand.vmem [shape: f32[2,2,32], index: 3, kind: output, shape index: {1}]
  %4 = xla_tuple %s2, %s3
  %s5 = sld [smem:[#allocation0]]
  $region49: #{stem_forward.5} parent=0
    _
  %s7 = ssub.s32 1, %s5
  %s8 = scalar_select 0, %s7, %s5
  loop: start=0, step=1, limit=4
  $region2: #{stem_forward.5} parent=0 // loop_pre_header
    _
  $region3: #{stem_forward.5} parent=0 // loop_header
    %s10 = sphi 0, %s14
    %p11 = scmp.ge.s32.totalorder %s10, 4
    %s20 = sphi 0, %s22
    %s23 = sphi 0, %s20
    %s24 = sphi 0, %s23
    %s40 = sphi 0, %s24
    %s44 = sphi 0, %s44
    %s46 = sphi 0, %s44
    %s47 = sphi 0, %s46
    %s61 = sphi 0, %s47
    %s67 = sphi 0, %s69
    %s70 = sphi 0, %s67
    %s71 = sphi 0, %s70
    %s87 = sphi 0, %s71
    %s93 = sphi 0, %s95
    %s96 = sphi 0, %s93
    %s97 = sphi 0, %s96
    %s113 = sphi 0, %s97
  $region4: #{stem_forward.5} parent=0 // loop_header_branch
    %13 = sbr.rel (%p11) target = $region8
  $region5: #{stem_forward.5} parent=0 // loop_body
    %s15 = ssub.s32 %s10, 1
    %s16 = ssub.s32 %s10, 2
    %s17 = sadd.s32 %s10, 1
    %s18 = ssub.s32 %s10, %s17
    %p19 = scmp.eq.s32.totalorder %s18, 0
    %s21 = sadd.s32 %s20, 1
    %s22 = scalar_select %p19, %s20, %s21
    %p25 = pneg %p19
    %p26 = scmp.eq.s32.totalorder %s10, 1
    %p27 = por %p25, %p26
    %p28 = scmp.ne.s32.totalorder %s20, %s23
    %p29 = scmp.eq.s32.totalorder %s10, 0
    %p30 = por %p28, %p29
    %p31 = scmp.ne.s32.totalorder %s20, %s23
    %p32 = scmp.eq.s32.totalorder %s15, 1
    %p33 = por %p31, %p32
    %p34 = scmp.ne.s32.totalorder %s23, %s24
    %p35 = scmp.eq.s32.totalorder %s15, 0
    %p36 = por %p34, %p35
    %p37 = scmp.ne.s32.totalorder %s23, %s24
    %p38 = scmp.eq.s32.totalorder %s16, 1
    %p39 = por %p37, %p38
    %p41 = scmp.ne.s32.totalorder %s24, %s40
    %p42 = scmp.eq.s32.totalorder %s16, 0
    %p43 = por %p41, %p42
    %s45 = sadd.s32 %s44, 1
    %p48 = scmp.eq.s32.totalorder %s10, 1
    %p49 = scmp.ne.s32.totalorder %s44, %s46
    %p50 = scmp.eq.s32.totalorder %s10, 0
    %p51 = por %p49, %p50
    %p52 = scmp.ne.s32.totalorder %s44, %s46
    %p53 = scmp.eq.s32.totalorder %s15, 1
    %p54 = por %p52, %p53
    %p55 = scmp.ne.s32.totalorder %s46, %s47
    %p56 = scmp.eq.s32.totalorder %s15, 0
    %p57 = por %p55, %p56
    %p58 = scmp.ne.s32.totalorder %s46, %s47
    %p59 = scmp.eq.s32.totalorder %s16, 1
    %p60 = por %p58, %p59
    %p62 = scmp.ne.s32.totalorder %s47, %s61
    %p63 = scmp.eq.s32.totalorder %s16, 0
    %p64 = por %p62, %p63
    %s65 = ssub.s32 %s10, %s17
    %p66 = scmp.eq.s32.totalorder %s65, 0
    %s68 = sadd.s32 %s67, 1
    %s69 = scalar_select %p66, %s67, %s68
    %p72 = pneg %p66
    %p73 = scmp.eq.s32.totalorder %s10, 1
    %p74 = por %p72, %p73
    %p75 = scmp.ne.s32.totalorder %s67, %s70
    %p76 = scmp.eq.s32.totalorder %s10, 0
    %p77 = por %p75, %p76
    %p78 = scmp.ne.s32.totalorder %s67, %s70
    %p79 = scmp.eq.s32.totalorder %s15, 1
    %p80 = por %p78, %p79
    %p81 = scmp.ne.s32.totalorder %s70, %s71
    %p82 = scmp.eq.s32.totalorder %s15, 0
    %p83 = por %p81, %p82
    %p84 = scmp.ne.s32.totalorder %s70, %s71
    %p85 = scmp.eq.s32.totalorder %s16, 1
    %p86 = por %p84, %p85
    %p88 = scmp.ne.s32.totalorder %s71, %s87
    %p89 = scmp.eq.s32.totalorder %s16, 0
    %p90 = por %p88, %p89
    %s91 = ssub.s32 %s10, %s17
    %p92 = scmp.eq.s32.totalorder %s91, 0
    %s94 = sadd.s32 %s93, 1
    %s95 = scalar_select %p92, %s93, %s94
    %p98 = pneg %p92
    %p99 = scmp.eq.s32.totalorder %s10, 1
    %p100 = por %p98, %p99
    %p101 = scmp.ne.s32.totalorder %s93, %s96
    %p102 = scmp.eq.s32.totalorder %s10, 0
    %p103 = por %p101, %p102
    %p104 = scmp.ne.s32.totalorder %s93, %s96
    %p105 = scmp.eq.s32.totalorder %s15, 1
    %p106 = por %p104, %p105
    %p107 = scmp.ne.s32.totalorder %s96, %s97
    %p108 = scmp.eq.s32.totalorder %s15, 0
    %p109 = por %p107, %p108
    %p110 = scmp.ne.s32.totalorder %s96, %s97
    %p111 = scmp.eq.s32.totalorder %s16, 1
    %p112 = por %p110, %p111
    %p114 = scmp.ne.s32.totalorder %s97, %s113
    %p115 = scmp.eq.s32.totalorder %s16, 0
    %p116 = por %p114, %p115
    %p117 = scmp.le.s32.totalorder 1, %s10
    %p118 = scmp.lt.s32.totalorder %s10, 3
    %p119 = pnand %p117, %p118
    %p120 = pneg %p119
    // Predicated region
    $region9: #{stem_forward.5} parent=5 // pred_check
      _
    $region10: #{stem_forward.5} parent=5 // pred_check_branch
      %122 = sbr.rel (%p119) target = $region12
    $region11: #{stem_forward.5} parent=5 // pred_region
      %s123 = ssub.s32 %s10, 1
      // Predicated region
      $region13: #{stem_forward.5} parent=11 // pred_check
        %p124 = pneg %p57
      $region14: #{stem_forward.5} parent=11 // pred_check_branch
        %126 = sbr.rel (%p124) target = $region16
      $region15: #{stem_forward.5} parent=11 // pred_region
        _
      $region16: #{stem_forward.5} parent=11 // pred_fallthru
        _
    $region12: #{stem_forward.5} parent=5 // pred_fallthru
      _
    %p127 = scmp.lt.s32.totalorder %s10, 2
    // Predicated region
    $region17: #{stem_forward.5} parent=5 // pred_check
      %p128 = pneg %p127
    $region18: #{stem_forward.5} parent=5 // pred_check_branch
      %130 = sbr.rel (%p128) target = $region20
    $region19: #{stem_forward.5} parent=5 // pred_region
      // Predicated region
      $region21: #{stem_forward.5} parent=19 // pred_check
        %p131 = pneg %p30
      $region22: #{stem_forward.5} parent=19 // pred_check_branch
        %133 = sbr.rel (%p131) target = $region24
      $region23: #{stem_forward.5} parent=19 // pred_region
        %s134 = smul.u32 2, %s10
        %p135 = scmp.lt.s32.totalorder %s134, 3
        %s136 = scalar_select %p135, %s134, 3
        %s137 = smul.addr %s136, 3
        %s138 = smul.addr %s137, 4
        %s139 = scalar_lea.vmem %s0, %s138
        %s140 = smul.u32 2, %s10
      $region24: #{stem_forward.5} parent=19 // pred_fallthru
        _
    $region20: #{stem_forward.5} parent=5 // pred_fallthru
      _
    %p141 = scmp.le.s32.totalorder 1, %s10
    %p142 = scmp.lt.s32.totalorder %s10, 3
    %p143 = pnand %p141, %p142
    %p144 = pneg %p143
    // Predicated region
    $region25: #{stem_forward.5} parent=5 // pred_check
      _
    $region26: #{stem_forward.5} parent=5 // pred_check_branch
      %146 = sbr.rel (%p143) target = $region28
    $region27: #{stem_forward.5} parent=5 // pred_region
      %s147 = ssub.s32 %s10, 1
      %s148 = smul.u32 2, %s15
      %p149 = scmp.lt.s32.totalorder %s148, 3
      %s150 = scalar_select %p149, %s148, 3
      %s151 = smul.addr %s150, 3
      %s152 = smul.addr %s151, 4
      %s153 = scalar_lea.vmem %s0, %s152
      %p154 = pneg %p36
      %p155 = pneg %p33
      %p156 = pneg %p57
      %p157 = pneg %p54
      %p158 = pneg %p83
      %p159 = pneg %p80
      %s160 = smul.u32 2, %s15
      %p161 = scmp.lt.s32.totalorder %s160, 3
      %s162 = scalar_select %p161, %s160, 3
      %s163 = smul.addr %s162, 4
      %s164 = scalar_lea.vmem %s2, %s163
      %p165 = pneg %p109
      %p166 = pneg %p106
      %p167 = scmp.lt.s32.totalorder %s15, 1
      %s168 = scalar_select %p167, %s15, 1
      %s169 = smul.addr %s168, 2
      %s170 = scalar_lea.vmem %s3, %s169
      %s171 = smul.u32 2, %s15
      %p172 = scmp.lt.s32.totalorder %s171, 3
      %s173 = scalar_select %p172, %s171, 3
      %s174 = smul.addr %s173, 3
      %s175 = smul.addr %s174, 4
      %s176 = scalar_lea.vmem %s0, %s175
      %s177 = smul.u32 2, %s15
      %s178 = smul.u32 2, %s15
      %p179 = scmp.lt.s32.totalorder %s178, 3
      %s180 = scalar_select %p179, %s178, 3
      %s181 = smul.addr %s180, 4
      %s182 = scalar_lea.vmem %s2, %s181
      %s183 = smul.u32 2, %s15
      %p184 = scmp.lt.s32.totalorder %s15, 1
      %s185 = scalar_select %p184, %s15, 1
      %s186 = smul.addr %s185, 2
      %s187 = scalar_lea.vmem %s3, %s186
      %v189 = vld [vmem:[%s176] sm:$0xff]
      %v190 = vld [vmem:[%s176 + $0x8] sm:$0xf]
      %v191 = vld [vmem:[%s176 + $0xc] sm:$0xff]
      %v192 = vld [vmem:[%s176 + $0x14] sm:$0xf]
      %v193 = vld [vmem:[%s1] sm:$0xf]
      %v194 = vld [vmem:[%s1 + $0x4] sm:$0xf]
      %v195 = vld [vmem:[%s1 + $0x8] sm:$0xf]
      %v196 = vld [vmem:[%s1 + $0xc] sm:$0xf]
      %v197 = vld [vmem:[%s1 + $0x10] sm:$0xf]
      %v198 = vld [vmem:[%s1 + $0x14] sm:$0xf]
      %v199 = vld [vmem:[%s1 + $0x18] sm:$0xf]
      %v200 = vld [vmem:[%s1 + $0x1c] sm:$0xf]
      %v201 = vld [vmem:[%s1 + $0x20] sm:$0xf]
      %v202 = vld [vmem:[%s1 + $0x24] sm:$0xf]
      %v203 = vld [vmem:[%s1 + $0x28] sm:$0xf]
      %v204 = vld [vmem:[%s1 + $0x2c] sm:$0xf]
      %v205 = vld [vmem:[%s1 + $0x30] sm:$0xf]
      %v206 = vld [vmem:[%s1 + $0x34] sm:$0xf]
      %v207 = vld [vmem:[%s1 + $0x38] sm:$0xf]
      %v208 = vld [vmem:[%s1 + $0x3c] sm:$0xf]
      %v209 = vld [vmem:[%s1 + $0x40] sm:$0xf]
      %v210 = vld [vmem:[%s1 + $0x44] sm:$0xf]
      %v211 = vld [vmem:[%s1 + $0x48] sm:$0xf]
      %v212 = vld [vmem:[%s1 + $0x4c] sm:$0xf]
      %v213 = vld [vmem:[%s1 + $0x50] sm:$0xf]
      %v214 = vld [vmem:[%s1 + $0x54] sm:$0xf]
      %v215 = vld [vmem:[%s1 + $0x58] sm:$0xf]
      %v216 = vld [vmem:[%s1 + $0x5c] sm:$0xf]
      %v217 = vld [vmem:[%s1 + $0x60] sm:$0xf]
      %v218 = vld [vmem:[%s1 + $0x64] sm:$0xf]
      %v219 = vld [vmem:[%s1 + $0x68] sm:$0xf]
      %v220 = vld [vmem:[%s1 + $0x6c] sm:$0xf]
      %v221 = vld [vmem:[%s1 + $0x70] sm:$0xf]
      %v222 = vld [vmem:[%s1 + $0x74] sm:$0xf]
      %v223 = vld [vmem:[%s1 + $0x78] sm:$0xf]
      %v224 = vld [vmem:[%s1 + $0x7c] sm:$0xf]
      %v225 = vld [vmem:[%s1 + $0x80] sm:$0xf]
      %v226 = vld [vmem:[%s1 + $0x84] sm:$0xf]
      %v227 = vld [vmem:[%s1 + $0x88] sm:$0xf]
      %v228 = vld [vmem:[%s1 + $0x8c] sm:$0xf]
      %v233 = vunpack.c.l.b16 %v189
      %v234 = vunpack.c.h.b16 %v189
      %v235 = vunpack.c.l.b16 %v190
      %v236 = vunpack.c.l.b16 %v191
      %v237 = vunpack.c.h.b16 %v191
      %v238 = vunpack.c.l.b16 %v192
      %v239 = vpack.c.b16 %v236, %v233
      %v240 = vpack.c.b16 %v237, %v234
      %v241 = vpack.c.b16 %v238, %v235
      %v280 = vunpack.c.l.b16 %v193
      %v281 = vunpack.c.l.b16 %v194
      %v282 = vunpack.c.l.b16 %v195
      %v283 = vunpack.c.l.b16 %v196
      %v284 = vunpack.c.l.b16 %v197
      %v285 = vunpack.c.l.b16 %v198
      %v286 = vunpack.c.l.b16 %v199
      %v287 = vunpack.c.l.b16 %v200
      %v288 = vunpack.c.l.b16 %v201
      %v289 = vunpack.c.l.b16 %v202
      %v290 = vunpack.c.l.b16 %v203
      %v291 = vunpack.c.l.b16 %v204
      %v292 = vunpack.c.l.b16 %v205
      %v293 = vunpack.c.l.b16 %v206
      %v294 = vunpack.c.l.b16 %v207
      %v295 = vunpack.c.l.b16 %v208
      %v296 = vunpack.c.l.b16 %v209
      %v297 = vunpack.c.l.b16 %v210
      %v298 = vunpack.c.l.b16 %v211
      %v299 = vunpack.c.l.b16 %v212
      %v300 = vunpack.c.l.b16 %v213
      %v301 = vunpack.c.l.b16 %v214
      %v302 = vunpack.c.l.b16 %v215
      %v303 = vunpack.c.l.b16 %v216
      %v304 = vunpack.c.l.b16 %v217
      %v305 = vunpack.c.l.b16 %v218
      %v306 = vunpack.c.l.b16 %v219
      %v307 = vunpack.c.l.b16 %v220
      %v308 = vunpack.c.l.b16 %v221
      %v309 = vunpack.c.l.b16 %v222
      %v310 = vunpack.c.l.b16 %v223
      %v311 = vunpack.c.l.b16 %v224
      %v312 = vunpack.c.l.b16 %v225
      %v313 = vunpack.c.l.b16 %v226
      %v314 = vunpack.c.l.b16 %v227
      %v315 = vunpack.c.l.b16 %v228
      %v316 = vpack.c.b16 %v281, %v280
      %v317 = vpack.c.b16 %v283, %v282
      %v318 = vpack.c.b16 %v285, %v284
      %v319 = vpack.c.b16 %v287, %v286
      %v320 = vpack.c.b16 %v289, %v288
      %v321 = vpack.c.b16 %v291, %v290
      %v322 = vpack.c.b16 %v293, %v292
      %v323 = vpack.c.b16 %v295, %v294
      %v324 = vpack.c.b16 %v297, %v296
      %v325 = vpack.c.b16 %v299, %v298
      %v326 = vpack.c.b16 %v301, %v300
      %v327 = vpack.c.b16 %v303, %v302
      %v328 = vpack.c.b16 %v305, %v304
      %v329 = vpack.c.b16 %v307, %v306
      %v330 = vpack.c.b16 %v309, %v308
      %v331 = vpack.c.b16 %v311, %v310
      %v332 = vpack.c.b16 %v313, %v312
      %v333 = vpack.c.b16 %v315, %v314
      %vm352 = vcmask 261120
      %v354 = vsel %vm352, %v241, 0
      %356 = vmatprep.subr.bf16.mxu0 0
      %357 = vmatpush1.bf16.msra.mxu0 %v323
      %358 = vmatprep.subr.bf16.mxu0 0
      %359 = vmatpush1.bf16.msra.mxu0 %v322
      %360 = vmatprep.subr.bf16.mxu0 0
      %361 = vmatpush1.bf16.msra.mxu0 %v321
      %362 = vmatprep.subr.bf16.mxu0 0
      %363 = vmatpush1.bf16.msra.mxu0 %v320
      %364 = vmatprep.subr.bf16.mxu0 0
      %365 = vmatpush1.bf16.msra.mxu0 %v319
      %366 = vmatprep.subr.bf16.mxu0 0
      %367 = vmatpush1.bf16.msra.mxu0 %v318
      %368 = vmatprep.subr.bf16.mxu0 0
      %369 = vmatpush1.bf16.msra.mxu0 %v317
      %370 = vmatprep.subr.bf16.mxu0 0
      %371 = vmatpush1.bf16.msra.mxu0 %v316
      %372 = vmatprep.subr.bf16.mxu0 0
      %373 = vmatpush2.bf16.msra.mxu0 %v331
      %374 = vmatprep.subr.bf16.mxu0 0
      %375 = vmatpush2.bf16.msra.mxu0 %v330
      %376 = vmatprep.subr.bf16.mxu0 0
      %377 = vmatpush2.bf16.msra.mxu0 %v329
      %378 = vmatprep.subr.bf16.mxu0 0
      %379 = vmatpush2.bf16.msra.mxu0 %v328
      %380 = vmatprep.subr.bf16.mxu0 0
      %381 = vmatpush2.bf16.msra.mxu0 %v327
      %382 = vmatprep.subr.bf16.mxu0 0
      %383 = vmatpush2.bf16.msra.mxu0 %v326
      %384 = vmatprep.subr.bf16.mxu0 0
      %385 = vmatpush2.bf16.msra.mxu0 %v325
      %386 = vmatprep.subr.bf16.mxu0 0
      %387 = vmatpush2.bf16.msra.mxu0 %v324
      %388 = vmatprep.mubr.bf16.mxu0 %v240
      %389 = vmatmul.mubr.bf16.gmra.mxu0 %v239
      %v390 = vpop.f32.mrf.mxu0
      %v391 = vadd.f32 0.0, %v390
      %v392 = vpop.f32.mrf.mxu0
      %v393 = vpop.f32.mrf.mxu0
      %v394 = vadd.f32 0.0, %v393
      %v395 = vpop.f32.mrf.mxu0
      %396 = vdwg.mxu0
      %397 = vmatprep.subr.bf16.mxu0 0
      %398 = vmatpush1.bf16.msra.mxu0 0
      %399 = vmatprep.subr.bf16.mxu0 0
      %400 = vmatpush1.bf16.msra.mxu0 0
      %401 = vmatprep.subr.bf16.mxu0 0
      %402 = vmatpush1.bf16.msra.mxu0 0
      %403 = vmatprep.subr.bf16.mxu0 0
      %404 = vmatpush1.bf16.msra.mxu0 0
      %405 = vmatprep.subr.bf16.mxu0 0
      %406 = vmatpush1.bf16.msra.mxu0 0
      %407 = vmatprep.subr.bf16.mxu0 0
      %408 = vmatpush1.bf16.msra.mxu0 0
      %409 = vmatprep.subr.bf16.mxu0 0
      %410 = vmatpush1.bf16.msra.mxu0 %v333
      %411 = vmatprep.subr.bf16.mxu0 0
      %412 = vmatpush1.bf16.msra.mxu0 %v332
      %413 = vmatprep.subr.bf16.mxu0 0
      %414 = vmatpush2.bf16.msra.mxu0 0
      %415 = vmatprep.subr.bf16.mxu0 0
      %416 = vmatpush2.bf16.msra.mxu0 0
      %417 = vmatprep.subr.bf16.mxu0 0
      %418 = vmatpush2.bf16.msra.mxu0 0
      %419 = vmatprep.subr.bf16.mxu0 0
      %420 = vmatpush2.bf16.msra.mxu0 0
      %421 = vmatprep.subr.bf16.mxu0 0
      %422 = vmatpush2.bf16.msra.mxu0 0
      %423 = vmatprep.subr.bf16.mxu0 0
      %424 = vmatpush2.bf16.msra.mxu0 0
      %425 = vmatprep.subr.bf16.mxu0 0
      %426 = vmatpush2.bf16.msra.mxu0 0
      %427 = vmatprep.subr.bf16.mxu0 0
      %428 = vmatpush2.bf16.msra.mxu0 0
      %429 = vmatprep.mubr.bf16.mxu0 0
      %430 = vmatmul.mubr.bf16.gmra.mxu0 %v354
      %v431 = vpop.f32.mrf.mxu0
      %v432 = vadd.f32 %v391, %v431
      %v433 = vpop.f32.mrf.mxu0
      %v434 = vpop.f32.mrf.mxu0
      %v435 = vadd.f32 %v394, %v434
      %v436 = vpop.f32.mrf.mxu0
      %437 = vdwg.mxu0
      %v438 = vpack.c.bf16 %v435, %v432
      %v440 = vunpack.c.l.b16 %v438
      %v441 = vunpack.c.h.b16 %v438
      %v442 = vpack.c.b16 %v440, %v440
      %v443 = vpack.c.b16 %v441, %v441
      %vm446 = vcmask 257024
      %447 = vst.msk [vmem:[%s182] sm:$0xf] %vm446, %v442
      %448 = vst.msk [vmem:[%s182 + $0x4] sm:$0xf] %vm446, %v443
      %s449 = smul.u32 %s15, 16
      %v450 = vlaneseq
      %v451 = vshrl.u32 %v450, 7
      %v452 = vadd.s32 %v451, 8
      %v453 = vstv %s449
      %v454 = vadd.s32 %v451, %v453
      %v455 = vadd.s32 %v452, %v453
      %vm456 = vcmp.lt.s32.totalorder %v454, 32
      %vm457 = vcmp.lt.s32.totalorder %v455, 32
      %v458 = vsel %vm456, 1, 0
      %v459 = vsel %vm457, 1, 0
      %v460 = vcvt.s32.f32 %v458
      %v461 = vcvt.s32.f32 %v459
      %s462 = ssub.s32 32, %s449
      %p463 = scmp.lt.s32.totalorder %s462, 16
      %s464 = scalar_select %p463, %s462, 16
      %s465 = scvt.s32.f32 %s464
      %v466 = vsel %vm352, %v432, 0.0
      %v467 = vsel %vm352, %v435, 0.0
      %v468 = vadd.f32 %v466, %v467
      %v469 = vrot.slane %v468, 4
      %v470 = vadd.f32 %v468, %v469
      %v471 = vrot.slane %v470, 2
      %v472 = vadd.f32 %v470, %v471
      %v473 = vrot.slane %v472, 1
      %v474 = vadd.f32 %v472, %v473
      %v475 = vstv %s465
      %v476 = vrcp.pop %v475
      %v477 = vmul.f32 %v474, %v476
      %v478 = vsub.f32 %v432, %v477
      %v479 = vsub.f32 %v435, %v477
      %v480 = vmul.f32 %v478, %v460
      %v481 = vmul.f32 %v479, %v461
      %v482 = vmul.f32 %v480, %v480
      %v483 = vmul.f32 %v481, %v481
      %v484 = vsel %vm352, %v482, 0.0
      %v485 = vsel %vm352, %v483, 0.0
      %v486 = vadd.f32 %v484, %v485
      %v487 = vrot.slane %v486, 4
      %v488 = vadd.f32 %v486, %v487
      %v489 = vrot.slane %v488, 2
      %v490 = vadd.f32 %v488, %v489
      %v491 = vrot.slane %v490, 1
      %v492 = vadd.f32 %v490, %v491
      %vm493 = vcmask 1040384
      %v494 = vsel %vm493, %v474, %v492
      %vm495 = vcmask 254976
      %496 = vst.msk [vmem:[%s187] sm:$0x3] %vm495, %v494
      %s497 = smul.u32 2, %s15
      %p498 = scmp.lt.s32.totalorder %s497, 3
      %s499 = scalar_select %p498, %s497, 3
      %s500 = smul.addr %s499, 4
      %s501 = scalar_lea.vmem %s2, %s500
      %p502 = scmp.lt.s32.totalorder %s15, 1
      %s503 = scalar_select %p502, %s15, 1
      %s504 = smul.addr %s503, 2
      %s505 = scalar_lea.vmem %s3, %s504
      // Predicated region
      $region29: #{stem_forward.5} parent=27 // pred_check
        %p506 = pneg %p80
      $region30: #{stem_forward.5} parent=27 // pred_check_branch
        %508 = sbr.rel (%p506) target = $region32
      $region31: #{stem_forward.5} parent=27 // pred_region
        %s509 = smul.u32 2, %s15
      $region32: #{stem_forward.5} parent=27 // pred_fallthru
        _
      // Predicated region
      $region33: #{stem_forward.5} parent=27 // pred_check
        %p510 = pneg %p106
      $region34: #{stem_forward.5} parent=27 // pred_check_branch
        %512 = sbr.rel (%p510) target = $region36
      $region35: #{stem_forward.5} parent=27 // pred_region
        _
      $region36: #{stem_forward.5} parent=27 // pred_fallthru
        _
    $region28: #{stem_forward.5} parent=5 // pred_fallthru
      _
    %p513 = scmp.le.s32.totalorder 2, %s10
    // Predicated region
    $region37: #{stem_forward.5} parent=5 // pred_check
      %p514 = pneg %p513
    $region38: #{stem_forward.5} parent=5 // pred_check_branch
      %516 = sbr.rel (%p514) target = $region40
    $region39: #{stem_forward.5} parent=5 // pred_region
      %s517 = ssub.s32 %s10, 2
      // Predicated region
      $region41: #{stem_forward.5} parent=39 // pred_check
        %p518 = pneg %p86
      $region42: #{stem_forward.5} parent=39 // pred_check_branch
        %520 = sbr.rel (%p518) target = $region44
      $region43: #{stem_forward.5} parent=39 // pred_region
        %s521 = smul.u32 2, %s16
        %p522 = scmp.lt.s32.totalorder %s521, 3
        %s523 = scalar_select %p522, %s521, 3
        %s524 = smul.addr %s523, 4
        %s525 = scalar_lea.vmem %s2, %s524
      $region44: #{stem_forward.5} parent=39 // pred_fallthru
        _
      // Predicated region
      $region45: #{stem_forward.5} parent=39 // pred_check
        %p526 = pneg %p112
      $region46: #{stem_forward.5} parent=39 // pred_check_branch
        %528 = sbr.rel (%p526) target = $region48
      $region47: #{stem_forward.5} parent=39 // pred_region
        %p529 = scmp.lt.s32.totalorder %s16, 1
        %s530 = scalar_select %p529, %s16, 1
        %s531 = smul.addr %s530, 2
        %s532 = scalar_lea.vmem %s3, %s531
      $region48: #{stem_forward.5} parent=39 // pred_fallthru
        _
    $region40: #{stem_forward.5} parent=5 // pred_fallthru
      _
  $region6: #{stem_forward.5} parent=0 // loop_footer
    %s14 = sadd.s32 1, %s10
  $region7: #{stem_forward.5} parent=0 // loop_footer_branch
    %9 = sbr.rel target = $region3
  $region8: #{stem_forward.5} parent=0 // loop_exit
    _

</llo_original>
